<compile_context>
chip_gen: v5e
topology: v5e:2x2
jax: 0.10.0
libtpu: 0.0.40
codegen_flags: <defaults>
</compile_context>

<pallas_src>
import functools

import jax
import jax.numpy as jnp
from jax import lax
from jax.experimental import pallas as pl
from jax.experimental.pallas import tpu as pltpu

EPS = 1e-6  # matches RMSNorm(eps=1e-6)


def _rmsnorm(x, w):
    # x: (..., D) f32, w: (1, D) f32
    return x * lax.rsqrt(jnp.mean(x * x, axis=-1, keepdims=True) + EPS) * w


def _sigmoid(x):
    return jax.nn.sigmoid(x)


def _silu(x):
    return x * jax.nn.sigmoid(x)


def _vmem_budget_bytes():
    """Physical per-core VMEM minus headroom.

    ~102 MiB on v5e/v6e (128 MiB), ~51 MiB on v7x (64 MiB). Falls back to a
    conservative 64 MiB cap (works on every chip) if the query fails.
    """
    try:
        cap = int(pltpu.get_tpu_info().vmem_capacity_bytes)
    except Exception:
        cap = 64 * 1024 * 1024
    return int(cap * 0.8)


def _weight_spec(block_shape, index_map, nbytes):
    """BlockSpec for a weight whose index_map never changes.

    Large weights are single-buffered: the same block is revisited on every
    grid step, so a second pipeline buffer is pure VMEM waste (critical on
    v7x's 64 MiB VMEM). Small weights keep the default (also keeps the tiny
    demo configuration on the plain, maximally compatible path).
    """
    if nbytes >= (2 << 20):
        try:
            return pl.BlockSpec(block_shape, index_map, pipeline_mode=pl.Buffered(1))
        except Exception:  # pipeline_mode unsupported on this jax -> default
            pass
    return pl.BlockSpec(block_shape, index_map)


# ----------------------------------------------------------------------------
# Kernel 1: one QLSTMBlock, gridded over (batch tiles, time chunks)
# ----------------------------------------------------------------------------
def qlstm_block_kernel(
    # inputs
    x_ref, h0_ref,
    n1_ref, wg_ref, bg_ref,
    n2_ref, wff_ref, bff_ref, wfo_ref, bfo_ref,
    # outputs
    y_ref, hnext_ref,
    # scratch
    h_carry, f_s, i_s,
    *, unroll,
):
    TL, TB, D = x_ref.shape
    FF = wfo_ref.shape[0]

    # Initialize the recurrent carry from the layer's initial hidden state on
    # the first time chunk of each batch tile.
    @pl.when(pl.program_id(1) == 0)
    def _():
        h_carry[...] = h0_ref[...]

    x = x_ref[...]                                      # (TL, TB, D) f32, time-major

    # ---- pre-QLSTM RMSNorm + fused gate projection (one lane-dense matmul) --
    xn = _rmsnorm(x, n1_ref[...])
    g = jnp.dot(xn.reshape(TL * TB, D).astype(jnp.bfloat16), wg_ref[...],
                preferred_element_type=jnp.float32) + bg_ref[...]
    # fused columns: [forget | input | input_gate | output_gate]
    f_s[...] = _sigmoid(g[:, 0 * D:1 * D]).reshape(TL, TB, D).astype(jnp.bfloat16)
    i_s[...] = (jnp.tanh(g[:, 1 * D:2 * D])
                * _sigmoid(g[:, 2 * D:3 * D])).reshape(TL, TB, D).astype(jnp.bfloat16)
    # Stash the output gate directly in y_ref (it is overwritten at the end of
    # the kernel anyway) — saves one full (TL, TB, D) scratch slab.
    y_ref[...] = _sigmoid(g[:, 3 * D:4 * D]).reshape(TL, TB, D)

    # ---- linear recurrence h_t = f_t * h_{t-1} + i_t  (h carried across chunks)
    # Only h = f*h_prev + i is on the carry chain; tanh(h)*output_gate is an
    # off-chain store that the scheduler hides under the unrolled carry.
    def step(t, h_prev):
        h = f_s[t].astype(jnp.float32) * h_prev + i_s[t].astype(jnp.float32)
        y_ref[t] = jnp.tanh(h) * y_ref[t]               # y_lstm, in place
        return h

    h_last = lax.fori_loop(0, TL, step, h_carry[...], unroll=unroll)
    h_carry[...] = h_last
    hnext_ref[...] = h_last            # block index constant over l: last write wins

    # ---- residual + pre-FFN RMSNorm + fused SwiGLU FFN + residual ------------
    # TODO(synk): nn.Dropout treated as identity (eval semantics).
    x1 = x + y_ref[...]
    xn2 = _rmsnorm(x1, n2_ref[...])
    ff = jnp.dot(xn2.reshape(TL * TB, D).astype(jnp.bfloat16), wff_ref[...],
                 preferred_element_type=jnp.float32) + bff_ref[...]
    hact = ff[:, :FF] * _silu(ff[:, FF:])               # fused columns: [fc | fc_act]
    fo = jnp.dot(hact.astype(jnp.bfloat16), wfo_ref[...],
                 preferred_element_type=jnp.float32) + bfo_ref[...]
    y_ref[...] = x1 + fo.reshape(TL, TB, D)


def _choose_block_tiles(B, L, D, FF, budget):
    """Pick (TB, TL) so one (TL, TB, D) chunk — x/y blocks (double-buffered),
    bf16 gate scratch, matmul temporaries and weights — fits the VMEM budget.

    Prefers configurations with >=2 batch tiles (so the 'parallel' axis can be
    sharded across v7x's two TensorCores), then the largest chunk (amortizes
    the ~0.35 us/step grid overhead)."""
    if B % 8 == 0:
        tb_cands = [t for t in (128, 64, 32, 16, 8) if B % t == 0]
    else:
        tb_cands = [B]                                  # (8,128) rule: full dim is ok
    tl_cands = [t for t in range(L, 0, -1) if L % t == 0]

    weight_bytes = 2 * (4 * D * D + 2 * D * FF + FF * D) \
        + 4 * (4 * D + 2 * FF + 3 * D)                  # bf16 weights + f32 biases/norms
    per_row = 56 * D + 12 * FF                          # bytes per (time, batch) row:
    # x,y (2x buf f32) + f,i (bf16) + g/ff/hact f32 temporaries + misc temps

    best = None
    for tb in tb_cands:
        fixed = weight_bytes + 4 * 5 * tb * D           # h0/hnext (2x buf) + h carry
        for tl in tl_cands:
            rows = tl * tb
            if rows > 1024:                             # bound (rows,4D)/(rows,2FF) temps
                continue
            if fixed + per_row * rows > budget:
                continue
            key = (1 if B // tb >= 2 else 0, rows, tl)
            if best is None or key > best[0]:
                best = (key, tb, tl)
    if best is None:                                    # degenerate fallback
        return tb_cands[-1], 1
    return best[1], best[2]


def qlstm_block_call(x_tm, hidden, p, *, unroll=8):
    L, B, D = x_tm.shape
    FF = p["wfo"].shape[0]
    budget = _vmem_budget_bytes()
    TB, TL = _choose_block_tiles(B, L, D, FF, budget)
    grid = (B // TB, L // TL)

    flops = 2 * B * L * (4 * D * D + 2 * D * FF + FF * D)
    transcendentals = 5 * B * L * D + B * L * FF
    bytes_accessed = (
        4 * (2 * B * L * D + 2 * B * D)                 # f32 activations + hidden
        + 2 * (4 * D * D + 2 * D * FF + FF * D)         # bf16 weights (read once)
        + 4 * (4 * D + 2 * FF + 3 * D))                 # biases + norm weights

    kern = functools.partial(qlstm_block_kernel, unroll=max(1, min(unroll, TL)))
    y, hnext = pl.pallas_call(
        kern,
        out_shape=(
            jax.ShapeDtypeStruct((L, B, D), jnp.float32),
            jax.ShapeDtypeStruct((B, D), jnp.float32),
        ),
        grid_spec=pltpu.PrefetchScalarGridSpec(
            num_scalar_prefetch=0,
            grid=grid,
            in_specs=[
                pl.BlockSpec((TL, TB, D), lambda b, l: (l, b, 0)),     # x (time-major)
                pl.BlockSpec((TB, D), lambda b, l: (b, 0)),            # h0
                pl.BlockSpec((1, D), lambda b, l: (0, 0)),             # n1
                _weight_spec((D, 4 * D), lambda b, l: (0, 0), 2 * D * 4 * D),   # wg
                pl.BlockSpec((1, 4 * D), lambda b, l: (0, 0)),         # bg
                pl.BlockSpec((1, D), lambda b, l: (0, 0)),             # n2
                _weight_spec((D, 2 * FF), lambda b, l: (0, 0), 2 * D * 2 * FF), # wff
                pl.BlockSpec((1, 2 * FF), lambda b, l: (0, 0)),        # bff
                _weight_spec((FF, D), lambda b, l: (0, 0), 2 * FF * D),         # wfo
                pl.BlockSpec((1, D), lambda b, l: (0, 0)),             # bfo
            ],
            out_specs=(
                pl.BlockSpec((TL, TB, D), lambda b, l: (l, b, 0)),     # y
                pl.BlockSpec((TB, D), lambda b, l: (b, 0)),            # hnext
            ),
            scratch_shapes=[
                pltpu.VMEM((TB, D), jnp.float32),         # persistent h carry
                pltpu.VMEM((TL, TB, D), jnp.bfloat16),    # forget gate
                pltpu.VMEM((TL, TB, D), jnp.bfloat16),    # input * input_gate
            ],
        ),
        compiler_params=pltpu.CompilerParams(
            dimension_semantics=("parallel", "arbitrary"),
            vmem_limit_bytes=budget,
        ),
        cost_estimate=pl.CostEstimate(
            flops=flops, transcendentals=transcendentals,
            bytes_accessed=bytes_accessed),
    )(x_tm, hidden, p["n1"], p["wg"], p["bg"], p["n2"],
      p["wff"], p["bff"], p["wfo"], p["bfo"])
    return y, hnext


# ----------------------------------------------------------------------------
# Kernel 2: final RMSNorm + vocab projection, tiled over (rows, vocab)
# ----------------------------------------------------------------------------
def head_kernel(x_ref, nw_ref, w_ref, b_ref, out_ref, xn_s):
    # Normalize the (TM, D) row tile once (vocab tile j == 0) and reuse it for
    # every vocab tile — the norm is XLU/VPU work that would otherwise be
    # recomputed V/TV times while the kernel should be MXU/DMA-bound.
    @pl.when(pl.program_id(1) == 0)
    def _():
        xn_s[...] = _rmsnorm(x_ref[...], nw_ref[...]).astype(jnp.bfloat16)
    out_ref[...] = (jnp.dot(xn_s[...], w_ref[...],
                            preferred_element_type=jnp.float32) + b_ref[...])


def _head_tiles(N, D, V, budget):
    TV = V
    for t in (512, 256, 128):
        if V % t == 0:
            TV = t
            break
    if N % 8 == 0:
        tm_cands = [t for t in (1024, 512, 256, 128, 64, 32, 16, 8) if N % t == 0]
    else:
        tm_cands = [N]
    TM = tm_cands[-1]
    for t in tm_cands:  # largest row tile that fits: cuts W re-streams N/TM times
        # x (2x buf f32) + bf16 norm scratch + W tile (2x buf bf16)
        # + bias (2x) + out tile (2x buf f32)
        fp = 8 * t * D + 2 * t * D + 4 * D * TV + 8 * TV + 8 * t * TV
        if fp <= budget:
            TM = t
            break
    return TM, TV


def head_call(x2d, norm_w, w_out, b_out):
    N, D = x2d.shape
    V = w_out.shape[1]
    budget = _vmem_budget_bytes()
    TM, TV = _head_tiles(N, D, V, budget)
    grid = (N // TM, V // TV)
    return pl.pallas_call(
        head_kernel,
        out_shape=jax.ShapeDtypeStruct((N, V), jnp.float32),
        grid_spec=pltpu.PrefetchScalarGridSpec(
            num_scalar_prefetch=0,
            grid=grid,
            in_specs=[
                pl.BlockSpec((TM, D), lambda i, j: (i, 0)),
                pl.BlockSpec((1, D), lambda i, j: (0, 0)),
                pl.BlockSpec((D, TV), lambda i, j: (0, j)),
                pl.BlockSpec((1, TV), lambda i, j: (0, j)),
            ],
            out_specs=pl.BlockSpec((TM, TV), lambda i, j: (i, j)),
            scratch_shapes=[pltpu.VMEM((TM, D), jnp.bfloat16)],   # normalized rows
        ),
        compiler_params=pltpu.CompilerParams(
            dimension_semantics=("parallel", "arbitrary"),
            vmem_limit_bytes=budget,
        ),
        cost_estimate=pl.CostEstimate(
            flops=2 * N * D * V,
            transcendentals=0,
            bytes_accessed=4 * N * D + 2 * D * V + 4 * N * V),
    )(x2d, norm_w, w_out, b_out)


# ----------------------------------------------------------------------------
# Parameter construction (deterministic, in-script) and full forward
# ----------------------------------------------------------------------------
def _linear_w(key, din, dout):
    return jax.random.normal(key, (din, dout), jnp.float32) / jnp.sqrt(
        jnp.float32(din))


def init_params(key, dim, dim_ff_hidden, num_layers, vocab_size):
    keys = jax.random.split(key, 2 + num_layers)
    params = {
        "embedding": jax.random.normal(keys[0], (vocab_size, dim), jnp.float32) * 0.02,
        "hidden_init": jnp.zeros((num_layers, dim), jnp.float32),
        "norm_w": jnp.ones((1, dim), jnp.float32),
        "w_out": _linear_w(keys[1], dim, vocab_size).astype(jnp.bfloat16),
        "b_out": jnp.zeros((1, vocab_size), jnp.float32),
        "layers": [],
    }
    for i in range(num_layers):
        ks = jax.random.split(keys[2 + i], 7)
        wf = _linear_w(ks[0], dim, dim)
        wi = _linear_w(ks[1], dim, dim)
        wig = _linear_w(ks[2], dim, dim)
        wog = _linear_w(ks[3], dim, dim)
        wfc = _linear_w(ks[4], dim, dim_ff_hidden)
        wact = _linear_w(ks[5], dim, dim_ff_hidden)
        wfo = _linear_w(ks[6], dim_ff_hidden, dim)
        params["layers"].append(dict(
            n1=jnp.ones((1, dim), jnp.float32),
            n2=jnp.ones((1, dim), jnp.float32),
            # fused gate weight: columns [forget | input | input_gate | output_gate]
            wg=jnp.concatenate([wf, wi, wig, wog], axis=1).astype(jnp.bfloat16),
            bg=jnp.zeros((1, 4 * dim), jnp.float32),
            # fused SwiGLU weight: columns [fc | fc_act]
            wff=jnp.concatenate([wfc, wact], axis=1).astype(jnp.bfloat16),
            bff=jnp.zeros((1, 2 * dim_ff_hidden), jnp.float32),
            wfo=wfo.astype(jnp.bfloat16),
            bfo=jnp.zeros((1, dim), jnp.float32),
        ))
    return params


def qlstm_lm_forward(tokens, params):
    B, L = tokens.shape
    D = params["embedding"].shape[1]
    # Embedding gathered directly in time-major order (L, B, D): avoids an
    # extra (B,L,D)->(L,B,D) HBM round trip before the first layer.
    x = jnp.take(params["embedding"], tokens.T, axis=0)           # (L, B, D)
    for i, lp in enumerate(params["layers"]):
        h0 = jnp.broadcast_to(params["hidden_init"][i][None, :], (B, D))
        x, _ = qlstm_block_call(x, h0, lp)
    logits = head_call(x.reshape(L * B, D), params["norm_w"],
                       params["w_out"], params["b_out"])          # (L*B, V)
    V = logits.shape[-1]
    return jnp.transpose(logits.reshape(L, B, V), (1, 0, 2))      # (B, L, V)


if __name__ == "__main__":
    B, L = 2, 8
    DIM, DIM_FF, NUM_LAYERS, VOCAB = 32, 64, 2, 128

    key = jax.random.PRNGKey(0)
    k_params, k_tok = jax.random.split(key)
    params = init_params(k_params, DIM, DIM_FF, NUM_LAYERS, VOCAB)
    tokens = jax.random.randint(k_tok, (B, L), 0, VOCAB, dtype=jnp.int32)

    logits = jax.jit(functools.partial(qlstm_lm_forward, params=params))(tokens)
    jax.block_until_ready(logits)

    assert logits.shape == (B, L, VOCAB), logits.shape
    assert logits.dtype == jnp.float32
    assert bool(jnp.all(jnp.isfinite(logits)))
    print("KERNEL_OK")
</pallas_src>

<mosaic_0001>
module attributes {stable_mosaic.version = 11 : i64} {
  func.func @head_kernel(%arg0: i32, %arg1: i32, %arg2: memref<16x32xf32, #tpu.memory_space<vmem>>, %arg3: memref<1x32xf32, #tpu.memory_space<vmem>>, %arg4: memref<32x128xbf16, #tpu.memory_space<vmem>>, %arg5: memref<1x128xf32, #tpu.memory_space<vmem>>, %arg6: memref<16x128xf32, #tpu.memory_space<vmem>>, %arg7: memref<16x32xbf16, #tpu.memory_space<vmem>>) attributes {dimension_semantics = [#tpu.dimension_semantics<parallel>, #tpu.dimension_semantics<arbitrary>], iteration_bounds = array<i64: 1, 1>, scalar_prefetch = 0 : i64, scratch_operands = 1 : i64, tpu.core_type = #tpu.core_type<tc>, window_params = [{transform_indices = @transform_0, window_bounds = array<i64: 16, 32>}, {pipeline_mode = #tpu.pipeline_mode<synchronous>, transform_indices = @transform_1, window_bounds = array<i64: 1, 32>}, {transform_indices = @transform_2, window_bounds = array<i64: 32, 128>}, {transform_indices = @transform_3, window_bounds = array<i64: 1, 128>}, {transform_indices = @transform_4, window_bounds = array<i64: 16, 128>}]} {
    %c0_i32 = arith.constant 0 : i32
    %0 = arith.cmpi eq, %arg1, %c0_i32 : i32
    %1 = arith.extui %0 : i1 to i32
    %c0_i32_0 = arith.constant 0 : i32
    %2 = arith.cmpi ne, %1, %c0_i32_0 : i32
    scf.if %2 {
      %c0_8 = arith.constant 0 : index
      %c0_9 = arith.constant 0 : index
      %10 = vector.load %arg2[%c0_8, %c0_9] : memref<16x32xf32, #tpu.memory_space<vmem>>, vector<16x32xf32>
      %c0_10 = arith.constant 0 : index
      %c0_11 = arith.constant 0 : index
      %11 = vector.load %arg3[%c0_10, %c0_11] : memref<1x32xf32, #tpu.memory_space<vmem>>, vector<1x32xf32>
      %12 = arith.mulf %10, %10 : vector<16x32xf32>
      %cst_12 = arith.constant dense<0.000000e+00> : vector<16xf32>
      %13 = vector.multi_reduction <add>, %12, %cst_12 [1] : vector<16x32xf32> to vector<16xf32>
      %14 = vector.shape_cast %13 : vector<16xf32> to vector<16x1xf32>
      %cst_13 = arith.constant 3.200000e+01 : f32
      %15 = vector.broadcast %cst_13 : f32 to vector<16x1xf32>
      %16 = arith.divf %14, %15 : vector<16x1xf32>
      %cst_14 = arith.constant 9.99999997E-7 : f32
      %17 = vector.broadcast %cst_14 : f32 to vector<16x1xf32>
      %18 = arith.addf %16, %17 : vector<16x1xf32>
      %19 = math.rsqrt %18 : vector<16x1xf32>
      %20 = vector.broadcast %19 : vector<16x1xf32> to vector<16x32xf32>
      %21 = arith.mulf %10, %20 : vector<16x32xf32>
      %22 = vector.broadcast %11 : vector<1x32xf32> to vector<16x32xf32>
      %23 = arith.mulf %21, %22 : vector<16x32xf32>
      %24 = arith.truncf %23 : vector<16x32xf32> to vector<16x32xbf16>
      %c0_15 = arith.constant 0 : index
      %c0_16 = arith.constant 0 : index
      %25 = vector.load %arg7[%c0_15, %c0_16] : memref<16x32xbf16, #tpu.memory_space<vmem>>, vector<16x32xbf16>
      tpu.vector_store %arg7[%c0_15, %c0_16], %24 {strides = array<i32>} : memref<16x32xbf16, #tpu.memory_space<vmem>>, vector<16x32xbf16>,
    } else {
    }
    %c0 = arith.constant 0 : index
    %c0_1 = arith.constant 0 : index
    %3 = vector.load %arg7[%c0, %c0_1] : memref<16x32xbf16, #tpu.memory_space<vmem>>, vector<16x32xbf16>
    %c0_2 = arith.constant 0 : index
    %c0_3 = arith.constant 0 : index
    %4 = vector.load %arg4[%c0_2, %c0_3] : memref<32x128xbf16, #tpu.memory_space<vmem>>, vector<32x128xbf16>
    %cst = arith.constant dense<0.000000e+00> : vector<16x128xf32>
    %5 = tpu.matmul %3, %4, %cst {dimension_numbers = #tpu.dot_dimension_numbers<[1], [0], [0], [1], [0, 0, 1, 1], [], []>} : vector<16x32xbf16>, vector<32x128xbf16>, vector<16x128xf32> -> vector<16x128xf32>
    %c0_4 = arith.constant 0 : index
    %c0_5 = arith.constant 0 : index
    %6 = vector.load %arg5[%c0_4, %c0_5] : memref<1x128xf32, #tpu.memory_space<vmem>>, vector<1x128xf32>
    %7 = vector.broadcast %6 : vector<1x128xf32> to vector<16x128xf32>
    %8 = arith.addf %5, %7 : vector<16x128xf32>
    %c0_6 = arith.constant 0 : index
    %c0_7 = arith.constant 0 : index
    %9 = vector.load %arg6[%c0_6, %c0_7] : memref<16x128xf32, #tpu.memory_space<vmem>>, vector<16x128xf32>
    tpu.vector_store %arg6[%c0_6, %c0_7], %8 {strides = array<i32>} : memref<16x128xf32, #tpu.memory_space<vmem>>, vector<16x128xf32>,
    return
  }
  func.func @transform_0(%arg0: i32, %arg1: i32) -> (i32, i32) {
    %c0_i32 = arith.constant 0 : i32
    %c0_i32_0 = arith.constant 0 : i32
    return %arg0, %c0_i32 : i32, i32
  }
  func.func @transform_1(%arg0: i32, %arg1: i32) -> (i32, i32) {
    %c0_i32 = arith.constant 0 : i32
    %c0_i32_0 = arith.constant 0 : i32
    %c0_i32_1 = arith.constant 0 : i32
    return %c0_i32, %c0_i32_0 : i32, i32
  }
  func.func @transform_2(%arg0: i32, %arg1: i32) -> (i32, i32) {
    %c0_i32 = arith.constant 0 : i32
    %c0_i32_0 = arith.constant 0 : i32
    return %c0_i32, %arg1 : i32, i32
  }
  func.func @transform_3(%arg0: i32, %arg1: i32) -> (i32, i32) {
    %c0_i32 = arith.constant 0 : i32
    %c0_i32_0 = arith.constant 0 : i32
    return %c0_i32, %arg1 : i32, i32
  }
  func.func @transform_4(%arg0: i32, %arg1: i32) -> (i32, i32) {
    %c0_i32 = arith.constant 0 : i32
    return %arg0, %arg1 : i32, i32
  }
}

module attributes {stable_mosaic.version = 11 : i64} {
  func.func @qlstm_block_kernel(%arg0: i32, %arg1: i32, %arg2: memref<8x2x32xf32, #tpu.memory_space<vmem>>, %arg3: memref<2x32xf32, #tpu.memory_space<vmem>>, %arg4: memref<1x32xf32, #tpu.memory_space<vmem>>, %arg5: memref<32x128xbf16, #tpu.memory_space<vmem>>, %arg6: memref<1x128xf32, #tpu.memory_space<vmem>>, %arg7: memref<1x32xf32, #tpu.memory_space<vmem>>, %arg8: memref<32x128xbf16, #tpu.memory_space<vmem>>, %arg9: memref<1x128xf32, #tpu.memory_space<vmem>>, %arg10: memref<64x32xbf16, #tpu.memory_space<vmem>>, %arg11: memref<1x32xf32, #tpu.memory_space<vmem>>, %arg12: memref<8x2x32xf32, #tpu.memory_space<vmem>>, %arg13: memref<2x32xf32, #tpu.memory_space<vmem>>, %arg14: memref<2x32xf32, #tpu.memory_space<vmem>>, %arg15: memref<8x2x32xbf16, #tpu.memory_space<vmem>>, %arg16: memref<8x2x32xbf16, #tpu.memory_space<vmem>>) attributes {dimension_semantics = [#tpu.dimension_semantics<parallel>, #tpu.dimension_semantics<arbitrary>], iteration_bounds = array<i64: 1, 1>, scalar_prefetch = 0 : i64, scratch_operands = 3 : i64, tpu.core_type = #tpu.core_type<tc>, window_params = [{transform_indices = @transform_0, window_bounds = array<i64: 8, 2, 32>}, {transform_indices = @transform_1, window_bounds = array<i64: 2, 32>}, {pipeline_mode = #tpu.pipeline_mode<synchronous>, transform_indices = @transform_2, window_bounds = array<i64: 1, 32>}, {pipeline_mode = #tpu.pipeline_mode<synchronous>, transform_indices = @transform_3, window_bounds = array<i64: 32, 128>}, {pipeline_mode = #tpu.pipeline_mode<synchronous>, transform_indices = @transform_4, window_bounds = array<i64: 1, 128>}, {pipeline_mode = #tpu.pipeline_mode<synchronous>, transform_indices = @transform_5, window_bounds = array<i64: 1, 32>}, {pipeline_mode = #tpu.pipeline_mode<synchronous>, transform_indices = @transform_6, window_bounds = array<i64: 32, 128>}, {pipeline_mode = #tpu.pipeline_mode<synchronous>, transform_indices = @transform_7, window_bounds = array<i64: 1, 128>}, {pipeline_mode = #tpu.pipeline_mode<synchronous>, transform_indices = @transform_8, window_bounds = array<i64: 64, 32>}, {pipeline_mode = #tpu.pipeline_mode<synchronous>, transform_indices = @transform_9, window_bounds = array<i64: 1, 32>}, {transform_indices = @transform_10, window_bounds = array<i64: 8, 2, 32>}, {transform_indices = @transform_11, window_bounds = array<i64: 2, 32>}]} {
    %c0_i32 = arith.constant 0 : i32
    %0 = arith.cmpi eq, %arg1, %c0_i32 : i32
    %1 = arith.extui %0 : i1 to i32
    %c0_i32_0 = arith.constant 0 : i32
    %2 = arith.cmpi ne, %1, %c0_i32_0 : i32
    scf.if %2 {
      %c0_117 = arith.constant 0 : index
      %c0_118 = arith.constant 0 : index
      %250 = vector.load %arg3[%c0_117, %c0_118] : memref<2x32xf32, #tpu.memory_space<vmem>>, vector<2x32xf32>
      %c0_119 = arith.constant 0 : index
      %c0_120 = arith.constant 0 : index
      %251 = vector.load %arg14[%c0_119, %c0_120] : memref<2x32xf32, #tpu.memory_space<vmem>>, vector<2x32xf32>
      tpu.vector_store %arg14[%c0_119, %c0_120], %250 {strides = array<i32>} : memref<2x32xf32, #tpu.memory_space<vmem>>, vector<2x32xf32>,
    } else {
    }
    %c0 = arith.constant 0 : index
    %c0_1 = arith.constant 0 : index
    %c0_2 = arith.constant 0 : index
    %3 = vector.load %arg2[%c0, %c0_1, %c0_2] : memref<8x2x32xf32, #tpu.memory_space<vmem>>, vector<8x2x32xf32>
    %c0_3 = arith.constant 0 : index
    %c0_4 = arith.constant 0 : index
    %4 = vector.load %arg4[%c0_3, %c0_4] : memref<1x32xf32, #tpu.memory_space<vmem>>, vector<1x32xf32>
    %5 = arith.mulf %3, %3 : vector<8x2x32xf32>
    %cst = arith.constant dense<0.000000e+00> : vector<8x2xf32>
    %6 = vector.multi_reduction <add>, %5, %cst [2] : vector<8x2x32xf32> to vector<8x2xf32>
    %7 = vector.shape_cast %6 : vector<8x2xf32> to vector<8x2x1xf32>
    %cst_5 = arith.constant 3.200000e+01 : f32
    %8 = vector.broadcast %cst_5 : f32 to vector<8x2x1xf32>
    %9 = arith.divf %7, %8 : vector<8x2x1xf32>
    %cst_6 = arith.constant 9.99999997E-7 : f32
    %10 = vector.broadcast %cst_6 : f32 to vector<8x2x1xf32>
    %11 = arith.addf %9, %10 : vector<8x2x1xf32>
    %12 = math.rsqrt %11 : vector<8x2x1xf32>
    %13 = vector.broadcast %12 : vector<8x2x1xf32> to vector<8x2x32xf32>
    %14 = arith.mulf %3, %13 : vector<8x2x32xf32>
    %15 = vector.shape_cast %4 : vector<1x32xf32> to vector<1x1x32xf32>
    %16 = vector.broadcast %15 : vector<1x1x32xf32> to vector<8x2x32xf32>
    %17 = arith.mulf %14, %16 : vector<8x2x32xf32>
    %18 = vector.shape_cast %17 : vector<8x2x32xf32> to vector<16x32xf32>
    %19 = arith.truncf %18 : vector<16x32xf32> to vector<16x32xbf16>
    %c0_7 = arith.constant 0 : index
    %c0_8 = arith.constant 0 : index
    %20 = vector.load %arg5[%c0_7, %c0_8] : memref<32x128xbf16, #tpu.memory_space<vmem>>, vector<32x128xbf16>
    %cst_9 = arith.constant dense<0.000000e+00> : vector<16x128xf32>
    %21 = tpu.matmul %19, %20, %cst_9 {dimension_numbers = #tpu.dot_dimension_numbers<[1], [0], [0], [1], [0, 0, 1, 1], [], []>} : vector<16x32xbf16>, vector<32x128xbf16>, vector<16x128xf32> -> vector<16x128xf32>
    %c0_10 = arith.constant 0 : index
    %c0_11 = arith.constant 0 : index
    %22 = vector.load %arg6[%c0_10, %c0_11] : memref<1x128xf32, #tpu.memory_space<vmem>>, vector<1x128xf32>
    %23 = vector.broadcast %22 : vector<1x128xf32> to vector<16x128xf32>
    %24 = arith.addf %21, %23 : vector<16x128xf32>
    %25 = vector.extract_strided_slice %24 {offsets = [0, 0], sizes = [16, 32], strides = [1, 1]} : vector<16x128xf32> to vector<16x32xf32>
    %26 = arith.negf %25 : vector<16x32xf32>
    %27 = math.exp %26 : vector<16x32xf32>
    %cst_12 = arith.constant 1.000000e+00 : f32
    %28 = vector.broadcast %cst_12 : f32 to vector<16x32xf32>
    %29 = arith.addf %28, %27 : vector<16x32xf32>
    %30 = arith.divf %28, %29 : vector<16x32xf32>
    %31 = vector.shape_cast %30 : vector<16x32xf32> to vector<8x2x32xf32>
    %32 = arith.truncf %31 : vector<8x2x32xf32> to vector<8x2x32xbf16>
    %c0_13 = arith.constant 0 : index
    %c0_14 = arith.constant 0 : index
    %c0_15 = arith.constant 0 : index
    %33 = vector.load %arg15[%c0_13, %c0_14, %c0_15] : memref<8x2x32xbf16, #tpu.memory_space<vmem>>, vector<8x2x32xbf16>
    tpu.vector_store %arg15[%c0_13, %c0_14, %c0_15], %32 {strides = array<i32>} : memref<8x2x32xbf16, #tpu.memory_space<vmem>>, vector<8x2x32xbf16>,
    %34 = vector.extract_strided_slice %24 {offsets = [0, 32], sizes = [16, 32], strides = [1, 1]} : vector<16x128xf32> to vector<16x32xf32>
    %35 = math.tanh %34 : vector<16x32xf32>
    %36 = vector.extract_strided_slice %24 {offsets = [0, 64], sizes = [16, 32], strides = [1, 1]} : vector<16x128xf32> to vector<16x32xf32>
    %37 = arith.negf %36 : vector<16x32xf32>
    %38 = math.exp %37 : vector<16x32xf32>
    %cst_16 = arith.constant 1.000000e+00 : f32
    %39 = vector.broadcast %cst_16 : f32 to vector<16x32xf32>
    %40 = arith.addf %39, %38 : vector<16x32xf32>
    %41 = arith.divf %39, %40 : vector<16x32xf32>
    %42 = arith.mulf %35, %41 : vector<16x32xf32>
    %43 = vector.shape_cast %42 : vector<16x32xf32> to vector<8x2x32xf32>
    %44 = arith.truncf %43 : vector<8x2x32xf32> to vector<8x2x32xbf16>
    %c0_17 = arith.constant 0 : index
    %c0_18 = arith.constant 0 : index
    %c0_19 = arith.constant 0 : index
    %45 = vector.load %arg16[%c0_17, %c0_18, %c0_19] : memref<8x2x32xbf16, #tpu.memory_space<vmem>>, vector<8x2x32xbf16>
    tpu.vector_store %arg16[%c0_17, %c0_18, %c0_19], %44 {strides = array<i32>} : memref<8x2x32xbf16, #tpu.memory_space<vmem>>, vector<8x2x32xbf16>,
    %46 = vector.extract_strided_slice %24 {offsets = [0, 96], sizes = [16, 32], strides = [1, 1]} : vector<16x128xf32> to vector<16x32xf32>
    %47 = arith.negf %46 : vector<16x32xf32>
    %48 = math.exp %47 : vector<16x32xf32>
    %cst_20 = arith.constant 1.000000e+00 : f32
    %49 = vector.broadcast %cst_20 : f32 to vector<16x32xf32>
    %50 = arith.addf %49, %48 : vector<16x32xf32>
    %51 = arith.divf %49, %50 : vector<16x32xf32>
    %52 = vector.shape_cast %51 : vector<16x32xf32> to vector<8x2x32xf32>
    %c0_21 = arith.constant 0 : index
    %c0_22 = arith.constant 0 : index
    %c0_23 = arith.constant 0 : index
    %53 = vector.load %arg12[%c0_21, %c0_22, %c0_23] : memref<8x2x32xf32, #tpu.memory_space<vmem>>, vector<8x2x32xf32>
    tpu.vector_store %arg12[%c0_21, %c0_22, %c0_23], %52 {strides = array<i32>} : memref<8x2x32xf32, #tpu.memory_space<vmem>>, vector<8x2x32xf32>,
    %c0_24 = arith.constant 0 : index
    %c0_25 = arith.constant 0 : index
    %54 = vector.load %arg14[%c0_24, %c0_25] : memref<2x32xf32, #tpu.memory_space<vmem>>, vector<2x32xf32>
    %c0_i32_26 = arith.constant 0 : i32
    %55 = arith.index_cast %c0_i32_26 : i32 to index
    %c0_27 = arith.constant 0 : index
    %c0_28 = arith.constant 0 : index
    %56 = vector.load %arg15[%55, %c0_27, %c0_28] : memref<8x2x32xbf16, #tpu.memory_space<vmem>>, vector<1x2x32xbf16>
    %57 = vector.shape_cast %56 : vector<1x2x32xbf16> to vector<2x32xbf16>
    %58 = arith.extf %57 : vector<2x32xbf16> to vector<2x32xf32>
    %59 = arith.mulf %58, %54 : vector<2x32xf32>
    %60 = arith.index_cast %c0_i32_26 : i32 to index
    %c0_29 = arith.constant 0 : index
    %c0_30 = arith.constant 0 : index
    %61 = vector.load %arg16[%60, %c0_29, %c0_30] : memref<8x2x32xbf16, #tpu.memory_space<vmem>>, vector<1x2x32xbf16>
    %62 = vector.shape_cast %61 : vector<1x2x32xbf16> to vector<2x32xbf16>
    %63 = arith.extf %62 : vector<2x32xbf16> to vector<2x32xf32>
    %64 = arith.addf %59, %63 : vector<2x32xf32>
    %65 = math.tanh %64 : vector<2x32xf32>
    %66 = arith.index_cast %c0_i32_26 : i32 to index
    %c0_31 = arith.constant 0 : index
    %c0_32 = arith.constant 0 : index
    %67 = vector.load %arg12[%66, %c0_31, %c0_32] : memref<8x2x32xf32, #tpu.memory_space<vmem>>, vector<1x2x32xf32>
    %68 = vector.shape_cast %67 : vector<1x2x32xf32> to vector<2x32xf32>
    %69 = arith.mulf %65, %68 : vector<2x32xf32>
    %70 = arith.index_cast %c0_i32_26 : i32 to index
    %c0_33 = arith.constant 0 : index
    %c0_34 = arith.constant 0 : index
    %71 = vector.load %arg12[%70, %c0_33, %c0_34] : memref<8x2x32xf32, #tpu.memory_space<vmem>>, vector<1x2x32xf32>
    %72 = vector.shape_cast %71 : vector<1x2x32xf32> to vector<2x32xf32>
    %73 = vector.shape_cast %69 : vector<2x32xf32> to vector<1x2x32xf32>
    tpu.vector_store %arg12[%70, %c0_33, %c0_34], %73 {strides = array<i32>} : memref<8x2x32xf32, #tpu.memory_space<vmem>>, vector<1x2x32xf32>,
    %c1_i32 = arith.constant 1 : i32
    %74 = arith.index_cast %c1_i32 : i32 to index
    %c0_35 = arith.constant 0 : index
    %c0_36 = arith.constant 0 : index
    %75 = vector.load %arg15[%74, %c0_35, %c0_36] : memref<8x2x32xbf16, #tpu.memory_space<vmem>>, vector<1x2x32xbf16>
    %76 = vector.shape_cast %75 : vector<1x2x32xbf16> to vector<2x32xbf16>
    %77 = arith.extf %76 : vector<2x32xbf16> to vector<2x32xf32>
    %78 = arith.mulf %77, %64 : vector<2x32xf32>
    %79 = arith.index_cast %c1_i32 : i32 to index
    %c0_37 = arith.constant 0 : index
    %c0_38 = arith.constant 0 : index
    %80 = vector.load %arg16[%79, %c0_37, %c0_38] : memref<8x2x32xbf16, #tpu.memory_space<vmem>>, vector<1x2x32xbf16>
    %81 = vector.shape_cast %80 : vector<1x2x32xbf16> to vector<2x32xbf16>
    %82 = arith.extf %81 : vector<2x32xbf16> to vector<2x32xf32>
    %83 = arith.addf %78, %82 : vector<2x32xf32>
    %84 = math.tanh %83 : vector<2x32xf32>
    %85 = arith.index_cast %c1_i32 : i32 to index
    %c0_39 = arith.constant 0 : index
    %c0_40 = arith.constant 0 : index
    %86 = vector.load %arg12[%85, %c0_39, %c0_40] : memref<8x2x32xf32, #tpu.memory_space<vmem>>, vector<1x2x32xf32>
    %87 = vector.shape_cast %86 : vector<1x2x32xf32> to vector<2x32xf32>
    %88 = arith.mulf %84, %87 : vector<2x32xf32>
    %89 = arith.index_cast %c1_i32 : i32 to index
    %c0_41 = arith.constant 0 : index
    %c0_42 = arith.constant 0 : index
    %90 = vector.load %arg12[%89, %c0_41, %c0_42] : memref<8x2x32xf32, #tpu.memory_space<vmem>>, vector<1x2x32xf32>
    %91 = vector.shape_cast %90 : vector<1x2x32xf32> to vector<2x32xf32>
    %92 = vector.shape_cast %88 : vector<2x32xf32> to vector<1x2x32xf32>
    tpu.vector_store %arg12[%89, %c0_41, %c0_42], %92 {strides = array<i32>} : memref<8x2x32xf32, #tpu.memory_space<vmem>>, vector<1x2x32xf32>,
    %c2_i32 = arith.constant 2 : i32
    %93 = arith.index_cast %c2_i32 : i32 to index
    %c0_43 = arith.constant 0 : index
    %c0_44 = arith.constant 0 : index
    %94 = vector.load %arg15[%93, %c0_43, %c0_44] : memref<8x2x32xbf16, #tpu.memory_space<vmem>>, vector<1x2x32xbf16>
    %95 = vector.shape_cast %94 : vector<1x2x32xbf16> to vector<2x32xbf16>
    %96 = arith.extf %95 : vector<2x32xbf16> to vector<2x32xf32>
    %97 = arith.mulf %96, %83 : vector<2x32xf32>
    %98 = arith.index_cast %c2_i32 : i32 to index
    %c0_45 = arith.constant 0 : index
    %c0_46 = arith.constant 0 : index
    %99 = vector.load %arg16[%98, %c0_45, %c0_46] : memref<8x2x32xbf16, #tpu.memory_space<vmem>>, vector<1x2x32xbf16>
    %100 = vector.shape_cast %99 : vector<1x2x32xbf16> to vector<2x32xbf16>
    %101 = arith.extf %100 : vector<2x32xbf16> to vector<2x32xf32>
    %102 = arith.addf %97, %101 : vector<2x32xf32>
    %103 = math.tanh %102 : vector<2x32xf32>
    %104 = arith.index_cast %c2_i32 : i32 to index
    %c0_47 = arith.constant 0 : index
    %c0_48 = arith.constant 0 : index
    %105 = vector.load %arg12[%104, %c0_47, %c0_48] : memref<8x2x32xf32, #tpu.memory_space<vmem>>, vector<1x2x32xf32>
    %106 = vector.shape_cast %105 : vector<1x2x32xf32> to vector<2x32xf32>
    %107 = arith.mulf %103, %106 : vector<2x32xf32>
    %108 = arith.index_cast %c2_i32 : i32 to index
    %c0_49 = arith.constant 0 : index
    %c0_50 = arith.constant 0 : index
    %109 = vector.load %arg12[%108, %c0_49, %c0_50] : memref<8x2x32xf32, #tpu.memory_space<vmem>>, vector<1x2x32xf32>
    %110 = vector.shape_cast %109 : vector<1x2x32xf32> to vector<2x32xf32>
    %111 = vector.shape_cast %107 : vector<2x32xf32> to vector<1x2x32xf32>
    tpu.vector_store %arg12[%108, %c0_49, %c0_50], %111 {strides = array<i32>} : memref<8x2x32xf32, #tpu.memory_space<vmem>>, vector<1x2x32xf32>,
    %c3_i32 = arith.constant 3 : i32
    %112 = arith.index_cast %c3_i32 : i32 to index
    %c0_51 = arith.constant 0 : index
    %c0_52 = arith.constant 0 : index
    %113 = vector.load %arg15[%112, %c0_51, %c0_52] : memref<8x2x32xbf16, #tpu.memory_space<vmem>>, vector<1x2x32xbf16>
    %114 = vector.shape_cast %113 : vector<1x2x32xbf16> to vector<2x32xbf16>
    %115 = arith.extf %114 : vector<2x32xbf16> to vector<2x32xf32>
    %116 = arith.mulf %115, %102 : vector<2x32xf32>
    %117 = arith.index_cast %c3_i32 : i32 to index
    %c0_53 = arith.constant 0 : index
    %c0_54 = arith.constant 0 : index
    %118 = vector.load %arg16[%117, %c0_53, %c0_54] : memref<8x2x32xbf16, #tpu.memory_space<vmem>>, vector<1x2x32xbf16>
    %119 = vector.shape_cast %118 : vector<1x2x32xbf16> to vector<2x32xbf16>
    %120 = arith.extf %119 : vector<2x32xbf16> to vector<2x32xf32>
    %121 = arith.addf %116, %120 : vector<2x32xf32>
    %122 = math.tanh %121 : vector<2x32xf32>
    %123 = arith.index_cast %c3_i32 : i32 to index
    %c0_55 = arith.constant 0 : index
    %c0_56 = arith.constant 0 : index
    %124 = vector.load %arg12[%123, %c0_55, %c0_56] : memref<8x2x32xf32, #tpu.memory_space<vmem>>, vector<1x2x32xf32>
    %125 = vector.shape_cast %124 : vector<1x2x32xf32> to vector<2x32xf32>
    %126 = arith.mulf %122, %125 : vector<2x32xf32>
    %127 = arith.index_cast %c3_i32 : i32 to index
    %c0_57 = arith.constant 0 : index
    %c0_58 = arith.constant 0 : index
    %128 = vector.load %arg12[%127, %c0_57, %c0_58] : memref<8x2x32xf32, #tpu.memory_space<vmem>>, vector<1x2x32xf32>
    %129 = vector.shape_cast %128 : vector<1x2x32xf32> to vector<2x32xf32>
    %130 = vector.shape_cast %126 : vector<2x32xf32> to vector<1x2x32xf32>
    tpu.vector_store %arg12[%127, %c0_57, %c0_58], %130 {strides = array<i32>} : memref<8x2x32xf32, #tpu.memory_space<vmem>>, vector<1x2x32xf32>,
    %c4_i32 = arith.constant 4 : i32
    %131 = arith.index_cast %c4_i32 : i32 to index
    %c0_59 = arith.constant 0 : index
    %c0_60 = arith.constant 0 : index
    %132 = vector.load %arg15[%131, %c0_59, %c0_60] : memref<8x2x32xbf16, #tpu.memory_space<vmem>>, vector<1x2x32xbf16>
    %133 = vector.shape_cast %132 : vector<1x2x32xbf16> to vector<2x32xbf16>
    %134 = arith.extf %133 : vector<2x32xbf16> to vector<2x32xf32>
    %135 = arith.mulf %134, %121 : vector<2x32xf32>
    %136 = arith.index_cast %c4_i32 : i32 to index
    %c0_61 = arith.constant 0 : index
    %c0_62 = arith.constant 0 : index
    %137 = vector.load %arg16[%136, %c0_61, %c0_62] : memref<8x2x32xbf16, #tpu.memory_space<vmem>>, vector<1x2x32xbf16>
    %138 = vector.shape_cast %137 : vector<1x2x32xbf16> to vector<2x32xbf16>
    %139 = arith.extf %138 : vector<2x32xbf16> to vector<2x32xf32>
    %140 = arith.addf %135, %139 : vector<2x32xf32>
    %141 = math.tanh %140 : vector<2x32xf32>
    %142 = arith.index_cast %c4_i32 : i32 to index
    %c0_63 = arith.constant 0 : index
    %c0_64 = arith.constant 0 : index
    %143 = vector.load %arg12[%142, %c0_63, %c0_64] : memref<8x2x32xf32, #tpu.memory_space<vmem>>, vector<1x2x32xf32>
    %144 = vector.shape_cast %143 : vector<1x2x32xf32> to vector<2x32xf32>
    %145 = arith.mulf %141, %144 : vector<2x32xf32>
    %146 = arith.index_cast %c4_i32 : i32 to index
    %c0_65 = arith.constant 0 : index
    %c0_66 = arith.constant 0 : index
    %147 = vector.load %arg12[%146, %c0_65, %c0_66] : memref<8x2x32xf32, #tpu.memory_space<vmem>>, vector<1x2x32xf32>
    %148 = vector.shape_cast %147 : vector<1x2x32xf32> to vector<2x32xf32>
    %149 = vector.shape_cast %145 : vector<2x32xf32> to vector<1x2x32xf32>
    tpu.vector_store %arg12[%146, %c0_65, %c0_66], %149 {strides = array<i32>} : memref<8x2x32xf32, #tpu.memory_space<vmem>>, vector<1x2x32xf32>,
    %c5_i32 = arith.constant 5 : i32
    %150 = arith.index_cast %c5_i32 : i32 to index
    %c0_67 = arith.constant 0 : index
    %c0_68 = arith.constant 0 : index
    %151 = vector.load %arg15[%150, %c0_67, %c0_68] : memref<8x2x32xbf16, #tpu.memory_space<vmem>>, vector<1x2x32xbf16>
    %152 = vector.shape_cast %151 : vector<1x2x32xbf16> to vector<2x32xbf16>
    %153 = arith.extf %152 : vector<2x32xbf16> to vector<2x32xf32>
    %154 = arith.mulf %153, %140 : vector<2x32xf32>
    %155 = arith.index_cast %c5_i32 : i32 to index
    %c0_69 = arith.constant 0 : index
    %c0_70 = arith.constant 0 : index
    %156 = vector.load %arg16[%155, %c0_69, %c0_70] : memref<8x2x32xbf16, #tpu.memory_space<vmem>>, vector<1x2x32xbf16>
    %157 = vector.shape_cast %156 : vector<1x2x32xbf16> to vector<2x32xbf16>
    %158 = arith.extf %157 : vector<2x32xbf16> to vector<2x32xf32>
    %159 = arith.addf %154, %158 : vector<2x32xf32>
    %160 = math.tanh %159 : vector<2x32xf32>
    %161 = arith.index_cast %c5_i32 : i32 to index
    %c0_71 = arith.constant 0 : index
    %c0_72 = arith.constant 0 : index
    %162 = vector.load %arg12[%161, %c0_71, %c0_72] : memref<8x2x32xf32, #tpu.memory_space<vmem>>, vector<1x2x32xf32>
    %163 = vector.shape_cast %162 : vector<1x2x32xf32> to vector<2x32xf32>
    %164 = arith.mulf %160, %163 : vector<2x32xf32>
    %165 = arith.index_cast %c5_i32 : i32 to index
    %c0_73 = arith.constant 0 : index
    %c0_74 = arith.constant 0 : index
    %166 = vector.load %arg12[%165, %c0_73, %c0_74] : memref<8x2x32xf32, #tpu.memory_space<vmem>>, vector<1x2x32xf32>
    %167 = vector.shape_cast %166 : vector<1x2x32xf32> to vector<2x32xf32>
    %168 = vector.shape_cast %164 : vector<2x32xf32> to vector<1x2x32xf32>
    tpu.vector_store %arg12[%165, %c0_73, %c0_74], %168 {strides = array<i32>} : memref<8x2x32xf32, #tpu.memory_space<vmem>>, vector<1x2x32xf32>,
    %c6_i32 = arith.constant 6 : i32
    %169 = arith.index_cast %c6_i32 : i32 to index
    %c0_75 = arith.constant 0 : index
    %c0_76 = arith.constant 0 : index
    %170 = vector.load %arg15[%169, %c0_75, %c0_76] : memref<8x2x32xbf16, #tpu.memory_space<vmem>>, vector<1x2x32xbf16>
    %171 = vector.shape_cast %170 : vector<1x2x32xbf16> to vector<2x32xbf16>
    %172 = arith.extf %171 : vector<2x32xbf16> to vector<2x32xf32>
    %173 = arith.mulf %172, %159 : vector<2x32xf32>
    %174 = arith.index_cast %c6_i32 : i32 to index
    %c0_77 = arith.constant 0 : index
    %c0_78 = arith.constant 0 : index
    %175 = vector.load %arg16[%174, %c0_77, %c0_78] : memref<8x2x32xbf16, #tpu.memory_space<vmem>>, vector<1x2x32xbf16>
    %176 = vector.shape_cast %175 : vector<1x2x32xbf16> to vector<2x32xbf16>
    %177 = arith.extf %176 : vector<2x32xbf16> to vector<2x32xf32>
    %178 = arith.addf %173, %177 : vector<2x32xf32>
    %179 = math.tanh %178 : vector<2x32xf32>
    %180 = arith.index_cast %c6_i32 : i32 to index
    %c0_79 = arith.constant 0 : index
    %c0_80 = arith.constant 0 : index
    %181 = vector.load %arg12[%180, %c0_79, %c0_80] : memref<8x2x32xf32, #tpu.memory_space<vmem>>, vector<1x2x32xf32>
    %182 = vector.shape_cast %181 : vector<1x2x32xf32> to vector<2x32xf32>
    %183 = arith.mulf %179, %182 : vector<2x32xf32>
    %184 = arith.index_cast %c6_i32 : i32 to index
    %c0_81 = arith.constant 0 : index
    %c0_82 = arith.constant 0 : index
    %185 = vector.load %arg12[%184, %c0_81, %c0_82] : memref<8x2x32xf32, #tpu.memory_space<vmem>>, vector<1x2x32xf32>
    %186 = vector.shape_cast %185 : vector<1x2x32xf32> to vector<2x32xf32>
    %187 = vector.shape_cast %183 : vector<2x32xf32> to vector<1x2x32xf32>
    tpu.vector_store %arg12[%184, %c0_81, %c0_82], %187 {strides = array<i32>} : memref<8x2x32xf32, #tpu.memory_space<vmem>>, vector<1x2x32xf32>,
    %c7_i32 = arith.constant 7 : i32
    %188 = arith.index_cast %c7_i32 : i32 to index
    %c0_83 = arith.constant 0 : index
    %c0_84 = arith.constant 0 : index
    %189 = vector.load %arg15[%188, %c0_83, %c0_84] : memref<8x2x32xbf16, #tpu.memory_space<vmem>>, vector<1x2x32xbf16>
    %190 = vector.shape_cast %189 : vector<1x2x32xbf16> to vector<2x32xbf16>
    %191 = arith.extf %190 : vector<2x32xbf16> to vector<2x32xf32>
    %192 = arith.mulf %191, %178 : vector<2x32xf32>
    %193 = arith.index_cast %c7_i32 : i32 to index
    %c0_85 = arith.constant 0 : index
    %c0_86 = arith.constant 0 : index
    %194 = vector.load %arg16[%193, %c0_85, %c0_86] : memref<8x2x32xbf16, #tpu.memory_space<vmem>>, vector<1x2x32xbf16>
    %195 = vector.shape_cast %194 : vector<1x2x32xbf16> to vector<2x32xbf16>
    %196 = arith.extf %195 : vector<2x32xbf16> to vector<2x32xf32>
    %197 = arith.addf %192, %196 : vector<2x32xf32>
    %198 = math.tanh %197 : vector<2x32xf32>
    %199 = arith.index_cast %c7_i32 : i32 to index
    %c0_87 = arith.constant 0 : index
    %c0_88 = arith.constant 0 : index
    %200 = vector.load %arg12[%199, %c0_87, %c0_88] : memref<8x2x32xf32, #tpu.memory_space<vmem>>, vector<1x2x32xf32>
    %201 = vector.shape_cast %200 : vector<1x2x32xf32> to vector<2x32xf32>
    %202 = arith.mulf %198, %201 : vector<2x32xf32>
    %203 = arith.index_cast %c7_i32 : i32 to index
    %c0_89 = arith.constant 0 : index
    %c0_90 = arith.constant 0 : index
    %204 = vector.load %arg12[%203, %c0_89, %c0_90] : memref<8x2x32xf32, #tpu.memory_space<vmem>>, vector<1x2x32xf32>
    %205 = vector.shape_cast %204 : vector<1x2x32xf32> to vector<2x32xf32>
    %206 = vector.shape_cast %202 : vector<2x32xf32> to vector<1x2x32xf32>
    tpu.vector_store %arg12[%203, %c0_89, %c0_90], %206 {strides = array<i32>} : memref<8x2x32xf32, #tpu.memory_space<vmem>>, vector<1x2x32xf32>,
    %c8_i32 = arith.constant 8 : i32
    %c0_91 = arith.constant 0 : index
    %c0_92 = arith.constant 0 : index
    %207 = vector.load %arg14[%c0_91, %c0_92] : memref<2x32xf32, #tpu.memory_space<vmem>>, vector<2x32xf32>
    tpu.vector_store %arg14[%c0_91, %c0_92], %197 {strides = array<i32>} : memref<2x32xf32, #tpu.memory_space<vmem>>, vector<2x32xf32>,
    %c0_93 = arith.constant 0 : index
    %c0_94 = arith.constant 0 : index
    %208 = vector.load %arg13[%c0_93, %c0_94] : memref<2x32xf32, #tpu.memory_space<vmem>>, vector<2x32xf32>
    tpu.vector_store %arg13[%c0_93, %c0_94], %197 {strides = array<i32>} : memref<2x32xf32, #tpu.memory_space<vmem>>, vector<2x32xf32>,
    %c0_95 = arith.constant 0 : index
    %c0_96 = arith.constant 0 : index
    %c0_97 = arith.constant 0 : index
    %209 = vector.load %arg12[%c0_95, %c0_96, %c0_97] : memref<8x2x32xf32, #tpu.memory_space<vmem>>, vector<8x2x32xf32>
    %210 = arith.addf %3, %209 : vector<8x2x32xf32>
    %c0_98 = arith.constant 0 : index
    %c0_99 = arith.constant 0 : index
    %211 = vector.load %arg7[%c0_98, %c0_99] : memref<1x32xf32, #tpu.memory_space<vmem>>, vector<1x32xf32>
    %212 = arith.mulf %210, %210 : vector<8x2x32xf32>
    %cst_100 = arith.constant dense<0.000000e+00> : vector<8x2xf32>
    %213 = vector.multi_reduction <add>, %212, %cst_100 [2] : vector<8x2x32xf32> to vector<8x2xf32>
    %214 = vector.shape_cast %213 : vector<8x2xf32> to vector<8x2x1xf32>
    %cst_101 = arith.constant 3.200000e+01 : f32
    %215 = vector.broadcast %cst_101 : f32 to vector<8x2x1xf32>
    %216 = arith.divf %214, %215 : vector<8x2x1xf32>
    %cst_102 = arith.constant 9.99999997E-7 : f32
    %217 = vector.broadcast %cst_102 : f32 to vector<8x2x1xf32>
    %218 = arith.addf %216, %217 : vector<8x2x1xf32>
    %219 = math.rsqrt %218 : vector<8x2x1xf32>
    %220 = vector.broadcast %219 : vector<8x2x1xf32> to vector<8x2x32xf32>
    %221 = arith.mulf %210, %220 : vector<8x2x32xf32>
    %222 = vector.shape_cast %211 : vector<1x32xf32> to vector<1x1x32xf32>
    %223 = vector.broadcast %222 : vector<1x1x32xf32> to vector<8x2x32xf32>
    %224 = arith.mulf %221, %223 : vector<8x2x32xf32>
    %225 = vector.shape_cast %224 : vector<8x2x32xf32> to vector<16x32xf32>
    %226 = arith.truncf %225 : vector<16x32xf32> to vector<16x32xbf16>
    %c0_103 = arith.constant 0 : index
    %c0_104 = arith.constant 0 : index
    %227 = vector.load %arg8[%c0_103, %c0_104] : memref<32x128xbf16, #tpu.memory_space<vmem>>, vector<32x128xbf16>
    %cst_105 = arith.constant dense<0.000000e+00> : vector<16x128xf32>
    %228 = tpu.matmul %226, %227, %cst_105 {dimension_numbers = #tpu.dot_dimension_numbers<[1], [0], [0], [1], [0, 0, 1, 1], [], []>} : vector<16x32xbf16>, vector<32x128xbf16>, vector<16x128xf32> -> vector<16x128xf32>
    %c0_106 = arith.constant 0 : index
    %c0_107 = arith.constant 0 : index
    %229 = vector.load %arg9[%c0_106, %c0_107] : memref<1x128xf32, #tpu.memory_space<vmem>>, vector<1x128xf32>
    %230 = vector.broadcast %229 : vector<1x128xf32> to vector<16x128xf32>
    %231 = arith.addf %228, %230 : vector<16x128xf32>
    %232 = vector.extract_strided_slice %231 {offsets = [0, 0], sizes = [16, 64], strides = [1, 1]} : vector<16x128xf32> to vector<16x64xf32>
    %233 = vector.extract_strided_slice %231 {offsets = [0, 64], sizes = [16, 64], strides = [1, 1]} : vector<16x128xf32> to vector<16x64xf32>
    %234 = arith.negf %233 : vector<16x64xf32>
    %235 = math.exp %234 : vector<16x64xf32>
    %cst_108 = arith.constant 1.000000e+00 : f32
    %236 = vector.broadcast %cst_108 : f32 to vector<16x64xf32>
    %237 = arith.addf %236, %235 : vector<16x64xf32>
    %238 = arith.divf %236, %237 : vector<16x64xf32>
    %239 = arith.mulf %233, %238 : vector<16x64xf32>
    %240 = arith.mulf %232, %239 : vector<16x64xf32>
    %241 = arith.truncf %240 : vector<16x64xf32> to vector<16x64xbf16>
    %c0_109 = arith.constant 0 : index
    %c0_110 = arith.constant 0 : index
    %242 = vector.load %arg10[%c0_109, %c0_110] : memref<64x32xbf16, #tpu.memory_space<vmem>>, vector<64x32xbf16>
    %cst_111 = arith.constant dense<0.000000e+00> : vector<16x32xf32>
    %243 = tpu.matmul %241, %242, %cst_111 {dimension_numbers = #tpu.dot_dimension_numbers<[1], [0], [0], [1], [0, 0, 1, 1], [], []>} : vector<16x64xbf16>, vector<64x32xbf16>, vector<16x32xf32> -> vector<16x32xf32>
    %c0_112 = arith.constant 0 : index
    %c0_113 = arith.constant 0 : index
    %244 = vector.load %arg11[%c0_112, %c0_113] : memref<1x32xf32, #tpu.memory_space<vmem>>, vector<1x32xf32>
    %245 = vector.broadcast %244 : vector<1x32xf32> to vector<16x32xf32>
    %246 = arith.addf %243, %245 : vector<16x32xf32>
    %247 = vector.shape_cast %246 : vector<16x32xf32> to vector<8x2x32xf32>
    %248 = arith.addf %210, %247 : vector<8x2x32xf32>
    %c0_114 = arith.constant 0 : index
    %c0_115 = arith.constant 0 : index
    %c0_116 = arith.constant 0 : index
    %249 = vector.load %arg12[%c0_114, %c0_115, %c0_116] : memref<8x2x32xf32, #tpu.memory_space<vmem>>, vector<8x2x32xf32>
    tpu.vector_store %arg12[%c0_114, %c0_115, %c0_116], %248 {strides = array<i32>} : memref<8x2x32xf32, #tpu.memory_space<vmem>>, vector<8x2x32xf32>,
    return
  }
  func.func @transform_0(%arg0: i32, %arg1: i32) -> (i32, i32, i32) {
    %c0_i32 = arith.constant 0 : i32
    %c0_i32_0 = arith.constant 0 : i32
    return %arg1, %arg0, %c0_i32 : i32, i32, i32
  }
  func.func @transform_1(%arg0: i32, %arg1: i32) -> (i32, i32) {
    %c0_i32 = arith.constant 0 : i32
    %c0_i32_0 = arith.constant 0 : i32
    return %arg0, %c0_i32 : i32, i32
  }
  func.func @transform_2(%arg0: i32, %arg1: i32) -> (i32, i32) {
    %c0_i32 = arith.constant 0 : i32
    %c0_i32_0 = arith.constant 0 : i32
    %c0_i32_1 = arith.constant 0 : i32
    return %c0_i32, %c0_i32_0 : i32, i32
  }
  func.func @transform_3(%arg0: i32, %arg1: i32) -> (i32, i32) {
    %c0_i32 = arith.constant 0 : i32
    %c0_i32_0 = arith.constant 0 : i32
    %c0_i32_1 = arith.constant 0 : i32
    return %c0_i32, %c0_i32_0 : i32, i32
  }
  func.func @transform_4(%arg0: i32, %arg1: i32) -> (i32, i32) {
    %c0_i32 = arith.constant 0 : i32
    %c0_i32_0 = arith.constant 0 : i32
    %c0_i32_1 = arith.constant 0 : i32
    return %c0_i32, %c0_i32_0 : i32, i32
  }
  func.func @transform_5(%arg0: i32, %arg1: i32) -> (i32, i32) {
    %c0_i32 = arith.constant 0 : i32
    %c0_i32_0 = arith.constant 0 : i32
    %c0_i32_1 = arith.constant 0 : i32
    return %c0_i32, %c0_i32_0 : i32, i32
  }
  func.func @transform_6(%arg0: i32, %arg1: i32) -> (i32, i32) {
    %c0_i32 = arith.constant 0 : i32
    %c0_i32_0 = arith.constant 0 : i32
    %c0_i32_1 = arith.constant 0 : i32
    return %c0_i32, %c0_i32_0 : i32, i32
  }
  func.func @transform_7(%arg0: i32, %arg1: i32) -> (i32, i32) {
    %c0_i32 = arith.constant 0 : i32
    %c0_i32_0 = arith.constant 0 : i32
    %c0_i32_1 = arith.constant 0 : i32
    return %c0_i32, %c0_i32_0 : i32, i32
  }
  func.func @transform_8(%arg0: i32, %arg1: i32) -> (i32, i32) {
    %c0_i32 = arith.constant 0 : i32
    %c0_i32_0 = arith.constant 0 : i32
    %c0_i32_1 = arith.constant 0 : i32
    return %c0_i32, %c0_i32_0 : i32, i32
  }
  func.func @transform_9(%arg0: i32, %arg1: i32) -> (i32, i32) {
    %c0_i32 = arith.constant 0 : i32
    %c0_i32_0 = arith.constant 0 : i32
    %c0_i32_1 = arith.constant 0 : i32
    return %c0_i32, %c0_i32_0 : i32, i32
  }
  func.func @transform_10(%arg0: i32, %arg1: i32) -> (i32, i32, i32) {
    %c0_i32 = arith.constant 0 : i32
    %c0_i32_0 = arith.constant 0 : i32
    return %arg1, %arg0, %c0_i32 : i32, i32, i32
  }
  func.func @transform_11(%arg0: i32, %arg1: i32) -> (i32, i32) {
    %c0_i32 = arith.constant 0 : i32
    %c0_i32_0 = arith.constant 0 : i32
    return %arg0, %c0_i32 : i32, i32
  }
}

</mosaic_0001>

<llo_original>
// kernel: qlstm_lm_forward.5
$region0: #{qlstm_lm_forward.5}
  #allocation0 [shape = 'u32[]', space=smem, size = 0x4, offset = 0x4, fixed_abs, tag = 'smem constant byte address 0x4 - core index']
  #allocation1 [shape = 'u32[72,128]{1,0:T(1,128)}', space=vmem, size = 0x9000, scoped, tag = 'internal scratch']
  #allocation2 [shape = 'bf16[16,32]{1,0:T(8,128)(2,1)}', space=vmem, size = 0x1000, scoped, tag = 'scratch operand']
  %s0 = inlined_call_operand.vmem [shape: f32[16,32], index: 0, kind: input, shape index: {}]
  %s1 = inlined_call_operand.vmem [shape: f32[1,32], index: 1, kind: input, shape index: {}]
  %s2 = inlined_call_operand.vmem [shape: bf16[32,128], index: 2, kind: input, shape index: {}]
  %s3 = inlined_call_operand.vmem [shape: f32[1,128], index: 3, kind: input, shape index: {}]
  %s4 = inlined_call_operand.vmem [shape: f32[16,128], index: 4, kind: output, shape index: {}]
  %s5 = sld [smem:[#allocation0]]
  $region30: #{qlstm_lm_forward.5} parent=0
    _
  %s7 = ssub.s32 1, %s5
  %s8 = scalar_select 0, %s7, %s5
  // Predicated region
  $region2: #{qlstm_lm_forward.5} parent=0 // pred_check
    _
  $region3: #{qlstm_lm_forward.5} parent=0 // pred_check_branch
    %10 = sbr.rel (0) target = $region5
  $region4: #{qlstm_lm_forward.5} parent=0 // pred_region
    _
  $region5: #{qlstm_lm_forward.5} parent=0 // pred_fallthru
    _
  // Predicated region
  $region6: #{qlstm_lm_forward.5} parent=0 // pred_check
    _
  $region7: #{qlstm_lm_forward.5} parent=0 // pred_check_branch
    %12 = sbr.rel (0) target = $region9
  $region8: #{qlstm_lm_forward.5} parent=0 // pred_region
    _
  $region9: #{qlstm_lm_forward.5} parent=0 // pred_fallthru
    _
  // Predicated region
  $region10: #{qlstm_lm_forward.5} parent=0 // pred_check
    _
  $region11: #{qlstm_lm_forward.5} parent=0 // pred_check_branch
    %14 = sbr.rel (0) target = $region13
  $region12: #{qlstm_lm_forward.5} parent=0 // pred_region
    _
  $region13: #{qlstm_lm_forward.5} parent=0 // pred_fallthru
    _
  // Predicated region
  $region14: #{qlstm_lm_forward.5} parent=0 // pred_check
    _
  $region15: #{qlstm_lm_forward.5} parent=0 // pred_check_branch
    %16 = sbr.rel (0) target = $region17
  $region16: #{qlstm_lm_forward.5} parent=0 // pred_region
    _
  $region17: #{qlstm_lm_forward.5} parent=0 // pred_fallthru
    _
  %p18 = scmp.eq.s32.totalorder 0, 0
  // Predicated region
  $region18: #{qlstm_lm_forward.5} parent=0 // pred_check
    %p19 = pneg %p18
  $region19: #{qlstm_lm_forward.5} parent=0 // pred_check_branch
    %21 = sbr.rel (%p19) target = $region21
  $region20: #{qlstm_lm_forward.5} parent=0 // pred_region
    %v22 = vld [vmem:[%s0] sm:$0xff]
    %v23 = vld [vmem:[%s0 + $0x8] sm:$0xff]
    %v24 = vld [vmem:[%s1] sm:$0x1]
    %v25 = vmul.f32 %v22, %v22
    %v26 = vmul.f32 %v23, %v23
    %vm27 = vcmask 261120
    %v28 = vsel %vm27, %v25, 0.0
    %29 = vadd.xlane.f32.xlu0 %v28
    %v30 = vpop.xlane.xlu0 %29
    %v31 = vsel %vm27, %v26, 0.0
    %32 = vadd.xlane.f32.xlu0 %v31
    %v33 = vpop.xlane.xlu0 %32
    %v34 = vrcp.pop 32.0
    %v35 = vmul.f32 32.0, %v34
    %v36 = vsub.f32 1.0, %v35
    %v37 = vmul.f32 %v34, %v36
    %v38 = vadd.f32 %v34, %v37
    %vm39 = vweird.f32 %v34
    %v40 = vsel %vm39, %v34, %v38
    %v41 = vmul.f32 %v30, %v40
    %v42 = vmul.f32 %v33, %v40
    %v43 = vadd.f32 %v41, 1e-06
    %v44 = vadd.f32 %v42, 1e-06
    %v45 = vrsqrt.pop %v43
    %v46 = vmul.f32 %v45, %v43
    %v47 = vmul.f32 %v46, %v45
    %v48 = vmul.f32 0.5, %v47
    %v49 = vsub.f32 1.5, %v48
    %v50 = vmul.f32 %v45, %v49
    %vm51 = vweird.f32 %v43
    %vm52 = vweird.f32 %v45
    %vm53 = vmor %vm51, %vm52
    %v54 = vsel %vm53, %v45, %v50
    %v55 = vrsqrt.pop %v44
    %v56 = vmul.f32 %v55, %v44
    %v57 = vmul.f32 %v56, %v55
    %v58 = vmul.f32 0.5, %v57
    %v59 = vsub.f32 1.5, %v58
    %v60 = vmul.f32 %v55, %v59
    %vm61 = vweird.f32 %v44
    %vm62 = vweird.f32 %v55
    %vm63 = vmor %vm61, %vm62
    %v64 = vsel %vm63, %v55, %v60
    %v65 = vmul.f32 %v22, %v54
    %v66 = vmul.f32 %v23, %v64
    %v68 = vperm.slane %v24, 0
    %v70 = vmul.f32 %v65, %v68
    %v71 = vmul.f32 %v66, %v68
    %v72 = vpack.c.bf16 %v70, %v70
    %v73 = vpack.c.bf16 %v71, %v71
    %vm74 = vcmask 257024
    %75 = vst.msk [vmem:[#allocation2] sm:$0xf] %vm74, %v72
    %76 = vst.msk [vmem:[#allocation2 + $0x4] sm:$0xf] %vm74, %v73
  $region21: #{qlstm_lm_forward.5} parent=0 // pred_fallthru
    _
  %v77 = vld [vmem:[#allocation2] sm:$0xf]
  %v78 = vld [vmem:[#allocation2 + $0x4] sm:$0xf]
  %v79 = vld [vmem:[%s2] sm:$0xf]
  %v80 = vld [vmem:[%s2 + $0x4] sm:$0xf]
  %v81 = vld [vmem:[%s2 + $0x8] sm:$0xf]
  %v82 = vld [vmem:[%s2 + $0xc] sm:$0xf]
  %v83 = vld [vmem:[%s3] sm:$0x1]
  %v85 = vperm.slane %v83, 0
  %v89 = vunpack.c.l.b16 %v77
  %v90 = vunpack.c.l.b16 %v78
  %v91 = vpack.c.b16 %v90, %v89
  %v96 = vunpack.c.l.b16 %v79
  %v97 = vunpack.c.l.b16 %v80
  %v98 = vunpack.c.l.b16 %v81
  %v99 = vunpack.c.l.b16 %v82
  %v100 = vpack.c.b16 %v97, %v96
  %v101 = vpack.c.b16 %v99, %v98
  %vm104 = vcmask 261120
  %v106 = vsel %vm104, %v91, 0
  %108 = vmatpush.bf16.msra.mxu0 0
  %109 = vmatpush.bf16.msra.mxu0 0
  %110 = vmatpush.bf16.msra.mxu0 0
  %111 = vmatpush.bf16.msra.mxu0 0
  %112 = vmatpush.bf16.msra.mxu0 0
  %113 = vmatpush.bf16.msra.mxu0 0
  %114 = vmatpush.bf16.msra.mxu0 %v101
  %115 = vmatpush.bf16.msra.mxu0 %v100
  %116 = vmatmul.bf16.gmra.mxu0 %v106
  %v117 = vpop.f32.mrf.mxu0
  %v118 = vadd.f32 %v85, %v117
  %v119 = vpop.f32.mrf.mxu0
  %v120 = vadd.f32 %v85, %v119
  %121 = vdwg.mxu0
  %122 = vst [vmem:[%s4] sm:$0xff] %v118
  %123 = vst [vmem:[%s4 + $0x8] sm:$0xff] %v120
  // Predicated region
  $region22: #{qlstm_lm_forward.5} parent=0 // pred_check
    _
  $region23: #{qlstm_lm_forward.5} parent=0 // pred_check_branch
    %125 = sbr.rel (0) target = $region25
  $region24: #{qlstm_lm_forward.5} parent=0 // pred_region
    _
  $region25: #{qlstm_lm_forward.5} parent=0 // pred_fallthru
    _
  // Predicated region
  $region26: #{qlstm_lm_forward.5} parent=0 // pred_check
    _
  $region27: #{qlstm_lm_forward.5} parent=0 // pred_check_branch
    %127 = sbr.rel (0) target = $region29
  $region28: #{qlstm_lm_forward.5} parent=0 // pred_region
    _
  $region29: #{qlstm_lm_forward.5} parent=0 // pred_fallthru
    _

// kernel: qlstm_lm_forward.3
$region0: #{qlstm_lm_forward.3}
  #allocation0 [shape = 'u32[]', space=smem, size = 0x4, offset = 0x4, fixed_abs, tag = 'smem constant byte address 0x4 - core index']
  #allocation1 [shape = 'u32[72,128]{1,0:T(1,128)}', space=vmem, size = 0x9000, scoped, tag = 'internal scratch']
  #allocation2 [shape = 'f32[2,32]{1,0:T(2,128)}', space=vmem, size = 0x400, scoped, tag = 'scratch operand']
  #allocation3 [shape = 'bf16[8,2,32]{2,1,0:T(2,128)(2,1)}', space=vmem, size = 0x1000, scoped, tag = 'scratch operand']
  #allocation4 [shape = 'bf16[8,2,32]{2,1,0:T(2,128)(2,1)}', space=vmem, size = 0x1000, scoped, tag = 'scratch operand']
  %s0 = inlined_call_operand.vmem [shape: f32[8,2,32], index: 0, kind: input, shape index: {}]
  %s1 = inlined_call_operand.vmem [shape: f32[2,32], index: 1, kind: input, shape index: {}]
  %s2 = inlined_call_operand.vmem [shape: f32[1,32], index: 2, kind: input, shape index: {}, may-alias: {2,5}]
  %s3 = inlined_call_operand.vmem [shape: bf16[32,128], index: 3, kind: input, shape index: {}]
  %s4 = inlined_call_operand.vmem [shape: f32[1,128], index: 4, kind: input, shape index: {}, may-alias: {4,7}]
  %s5 = inlined_call_operand.vmem [shape: f32[1,32], index: 5, kind: input, shape index: {}, may-alias: {2,5}]
  %s6 = inlined_call_operand.vmem [shape: bf16[32,128], index: 6, kind: input, shape index: {}]
  %s7 = inlined_call_operand.vmem [shape: f32[1,128], index: 7, kind: input, shape index: {}, may-alias: {4,7}]
  %s8 = inlined_call_operand.vmem [shape: bf16[64,32], index: 8, kind: input, shape index: {}]
  %s9 = inlined_call_operand.vmem [shape: f32[1,32], index: 9, kind: input, shape index: {}]
  %s10 = inlined_call_operand.vmem [shape: f32[8,2,32], index: 10, kind: output, shape index: {0}]
  %s11 = inlined_call_operand.hbm [shape: f32[2,32], index: 11, kind: output, shape index: {1}]
  %12 = xla_tuple %s10, %s11
  %s13 = sld [smem:[#allocation0]]
  $region62: #{qlstm_lm_forward.3} parent=0
    _
  %s15 = ssub.s32 1, %s13
  %s16 = scalar_select 0, %s15, %s13
  $region1: #{qlstm_lm_forward.3} parent=0
    #allocation5 [shape = 'u8[1024]{0}', space=vmem, size = 0x400, scoped, tag = 'output window, operand 1, single buffered']
    #allocation6 [shape = 's32[1]{0}', space=sflag, size = 0x4, scoped, tag = 'scoped memory for qlstm_lm_forward.3']
    %17 = vsyncpa [#allocation6], 0
    // Predicated region
    $region2: #{qlstm_lm_forward.3} parent=1 // pred_check
      _
    $region3: #{qlstm_lm_forward.3} parent=1 // pred_check_branch
      %19 = sbr.rel (0) target = $region5
    $region4: #{qlstm_lm_forward.3} parent=1 // pred_region
      _
    $region5: #{qlstm_lm_forward.3} parent=1 // pred_fallthru
      _
    // Predicated region
    $region6: #{qlstm_lm_forward.3} parent=1 // pred_check
      _
    $region7: #{qlstm_lm_forward.3} parent=1 // pred_check_branch
      %21 = sbr.rel (0) target = $region9
    $region8: #{qlstm_lm_forward.3} parent=1 // pred_region
      _
    $region9: #{qlstm_lm_forward.3} parent=1 // pred_fallthru
      _
    // Predicated region
    $region10: #{qlstm_lm_forward.3} parent=1 // pred_check
      _
    $region11: #{qlstm_lm_forward.3} parent=1 // pred_check_branch
      %23 = sbr.rel (0) target = $region13
    $region12: #{qlstm_lm_forward.3} parent=1 // pred_region
      _
    $region13: #{qlstm_lm_forward.3} parent=1 // pred_fallthru
      _
    // Predicated region
    $region14: #{qlstm_lm_forward.3} parent=1 // pred_check
      _
    $region15: #{qlstm_lm_forward.3} parent=1 // pred_check_branch
      %25 = sbr.rel (0) target = $region17
    $region16: #{qlstm_lm_forward.3} parent=1 // pred_region
      _
    $region17: #{qlstm_lm_forward.3} parent=1 // pred_fallthru
      _
    // Predicated region
    $region18: #{qlstm_lm_forward.3} parent=1 // pred_check
      _
    $region19: #{qlstm_lm_forward.3} parent=1 // pred_check_branch
      %27 = sbr.rel (0) target = $region21
    $region20: #{qlstm_lm_forward.3} parent=1 // pred_region
      _
    $region21: #{qlstm_lm_forward.3} parent=1 // pred_fallthru
      _
    // Predicated region
    $region22: #{qlstm_lm_forward.3} parent=1 // pred_check
      _
    $region23: #{qlstm_lm_forward.3} parent=1 // pred_check_branch
      %29 = sbr.rel (0) target = $region25
    $region24: #{qlstm_lm_forward.3} parent=1 // pred_region
      _
    $region25: #{qlstm_lm_forward.3} parent=1 // pred_fallthru
      _
    // Predicated region
    $region26: #{qlstm_lm_forward.3} parent=1 // pred_check
      _
    $region27: #{qlstm_lm_forward.3} parent=1 // pred_check_branch
      %31 = sbr.rel (0) target = $region29
    $region28: #{qlstm_lm_forward.3} parent=1 // pred_region
      _
    $region29: #{qlstm_lm_forward.3} parent=1 // pred_fallthru
      _
    // Predicated region
    $region30: #{qlstm_lm_forward.3} parent=1 // pred_check
      _
    $region31: #{qlstm_lm_forward.3} parent=1 // pred_check_branch
      %33 = sbr.rel (0) target = $region33
    $region32: #{qlstm_lm_forward.3} parent=1 // pred_region
      _
    $region33: #{qlstm_lm_forward.3} parent=1 // pred_fallthru
      _
    // Predicated region
    $region34: #{qlstm_lm_forward.3} parent=1 // pred_check
      _
    $region35: #{qlstm_lm_forward.3} parent=1 // pred_check_branch
      %35 = sbr.rel (0) target = $region37
    $region36: #{qlstm_lm_forward.3} parent=1 // pred_region
      _
    $region37: #{qlstm_lm_forward.3} parent=1 // pred_fallthru
      _
    // Predicated region
    $region38: #{qlstm_lm_forward.3} parent=1 // pred_check
      _
    $region39: #{qlstm_lm_forward.3} parent=1 // pred_check_branch
      %37 = sbr.rel (0) target = $region41
    $region40: #{qlstm_lm_forward.3} parent=1 // pred_region
      _
    $region41: #{qlstm_lm_forward.3} parent=1 // pred_fallthru
      _
    %p39 = scmp.eq.s32.totalorder 0, 0
    // Predicated region
    $region42: #{qlstm_lm_forward.3} parent=1 // pred_check
      %p40 = pneg %p39
    $region43: #{qlstm_lm_forward.3} parent=1 // pred_check_branch
      %42 = sbr.rel (%p40) target = $region45
    $region44: #{qlstm_lm_forward.3} parent=1 // pred_region
      %v43 = vld [vmem:[%s1] sm:$0x3]
      %vm44 = vcmask 254976
      %45 = vst.msk [vmem:[#allocation2] sm:$0x3] %vm44, %v43
    $region45: #{qlstm_lm_forward.3} parent=1 // pred_fallthru
      _
    %v46 = vld [vmem:[%s0] sm:$0x3]
    %v47 = vld [vmem:[%s0 + $0x2] sm:$0x3]
    %v48 = vld [vmem:[%s0 + $0x4] sm:$0x3]
    %v49 = vld [vmem:[%s0 + $0x6] sm:$0x3]
    %v50 = vld [vmem:[%s0 + $0x8] sm:$0x3]
    %v51 = vld [vmem:[%s0 + $0xa] sm:$0x3]
    %v52 = vld [vmem:[%s0 + $0xc] sm:$0x3]
    %v53 = vld [vmem:[%s0 + $0xe] sm:$0x3]
    %v54 = vld [vmem:[%s2] sm:$0x1]
    %v55 = vmul.f32 %v46, %v46
    %v56 = vmul.f32 %v47, %v47
    %v57 = vmul.f32 %v48, %v48
    %v58 = vmul.f32 %v49, %v49
    %v59 = vmul.f32 %v50, %v50
    %v60 = vmul.f32 %v51, %v51
    %v61 = vmul.f32 %v52, %v52
    %v62 = vmul.f32 %v53, %v53
    %vm63 = vcmask 254976
    %v64 = vsel %vm63, %v55, 0.0
    %65 = vadd.xlane.f32.xlu0 %v64
    %v66 = vpop.xlane.xlu0 %65
    %v67 = vsel %vm63, %v56, 0.0
    %68 = vadd.xlane.f32.xlu0 %v67
    %v69 = vpop.xlane.xlu0 %68
    %v70 = vsel %vm63, %v57, 0.0
    %71 = vadd.xlane.f32.xlu0 %v70
    %v72 = vpop.xlane.xlu0 %71
    %v73 = vsel %vm63, %v58, 0.0
    %74 = vadd.xlane.f32.xlu0 %v73
    %v75 = vpop.xlane.xlu0 %74
    %v76 = vsel %vm63, %v59, 0.0
    %77 = vadd.xlane.f32.xlu0 %v76
    %v78 = vpop.xlane.xlu0 %77
    %v79 = vsel %vm63, %v60, 0.0
    %80 = vadd.xlane.f32.xlu0 %v79
    %v81 = vpop.xlane.xlu0 %80
    %v82 = vsel %vm63, %v61, 0.0
    %83 = vadd.xlane.f32.xlu0 %v82
    %v84 = vpop.xlane.xlu0 %83
    %v85 = vsel %vm63, %v62, 0.0
    %86 = vadd.xlane.f32.xlu0 %v85
    %v87 = vpop.xlane.xlu0 %86
    %v88 = vrcp.pop 32.0
    %v89 = vmul.f32 32.0, %v88
    %v90 = vsub.f32 1.0, %v89
    %v91 = vmul.f32 %v88, %v90
    %v92 = vadd.f32 %v88, %v91
    %vm93 = vweird.f32 %v88
    %v94 = vsel %vm93, %v88, %v92
    %v95 = vmul.f32 %v66, %v94
    %v96 = vmul.f32 %v69, %v94
    %v97 = vmul.f32 %v72, %v94
    %v98 = vmul.f32 %v75, %v94
    %v99 = vmul.f32 %v78, %v94
    %v100 = vmul.f32 %v81, %v94
    %v101 = vmul.f32 %v84, %v94
    %v102 = vmul.f32 %v87, %v94
    %v103 = vadd.f32 %v95, 1e-06
    %v104 = vadd.f32 %v96, 1e-06
    %v105 = vadd.f32 %v97, 1e-06
    %v106 = vadd.f32 %v98, 1e-06
    %v107 = vadd.f32 %v99, 1e-06
    %v108 = vadd.f32 %v100, 1e-06
    %v109 = vadd.f32 %v101, 1e-06
    %v110 = vadd.f32 %v102, 1e-06
    %v111 = vrsqrt.pop %v103
    %v112 = vmul.f32 %v111, %v103
    %v113 = vmul.f32 %v112, %v111
    %v114 = vmul.f32 0.5, %v113
    %v115 = vsub.f32 1.5, %v114
    %v116 = vmul.f32 %v111, %v115
    %vm117 = vweird.f32 %v103
    %vm118 = vweird.f32 %v111
    %vm119 = vmor %vm117, %vm118
    %v120 = vsel %vm119, %v111, %v116
    %v121 = vrsqrt.pop %v104
    %v122 = vmul.f32 %v121, %v104
    %v123 = vmul.f32 %v122, %v121
    %v124 = vmul.f32 0.5, %v123
    %v125 = vsub.f32 1.5, %v124
    %v126 = vmul.f32 %v121, %v125
    %vm127 = vweird.f32 %v104
    %vm128 = vweird.f32 %v121
    %vm129 = vmor %vm127, %vm128
    %v130 = vsel %vm129, %v121, %v126
    %v131 = vrsqrt.pop %v105
    %v132 = vmul.f32 %v131, %v105
    %v133 = vmul.f32 %v132, %v131
    %v134 = vmul.f32 0.5, %v133
    %v135 = vsub.f32 1.5, %v134
    %v136 = vmul.f32 %v131, %v135
    %vm137 = vweird.f32 %v105
    %vm138 = vweird.f32 %v131
    %vm139 = vmor %vm137, %vm138
    %v140 = vsel %vm139, %v131, %v136
    %v141 = vrsqrt.pop %v106
    %v142 = vmul.f32 %v141, %v106
    %v143 = vmul.f32 %v142, %v141
    %v144 = vmul.f32 0.5, %v143
    %v145 = vsub.f32 1.5, %v144
    %v146 = vmul.f32 %v141, %v145
    %vm147 = vweird.f32 %v106
    %vm148 = vweird.f32 %v141
    %vm149 = vmor %vm147, %vm148
    %v150 = vsel %vm149, %v141, %v146
    %v151 = vrsqrt.pop %v107
    %v152 = vmul.f32 %v151, %v107
    %v153 = vmul.f32 %v152, %v151
    %v154 = vmul.f32 0.5, %v153
    %v155 = vsub.f32 1.5, %v154
    %v156 = vmul.f32 %v151, %v155
    %vm157 = vweird.f32 %v107
    %vm158 = vweird.f32 %v151
    %vm159 = vmor %vm157, %vm158
    %v160 = vsel %vm159, %v151, %v156
    %v161 = vrsqrt.pop %v108
    %v162 = vmul.f32 %v161, %v108
    %v163 = vmul.f32 %v162, %v161
    %v164 = vmul.f32 0.5, %v163
    %v165 = vsub.f32 1.5, %v164
    %v166 = vmul.f32 %v161, %v165
    %vm167 = vweird.f32 %v108
    %vm168 = vweird.f32 %v161
    %vm169 = vmor %vm167, %vm168
    %v170 = vsel %vm169, %v161, %v166
    %v171 = vrsqrt.pop %v109
    %v172 = vmul.f32 %v171, %v109
    %v173 = vmul.f32 %v172, %v171
    %v174 = vmul.f32 0.5, %v173
    %v175 = vsub.f32 1.5, %v174
    %v176 = vmul.f32 %v171, %v175
    %vm177 = vweird.f32 %v109
    %vm178 = vweird.f32 %v171
    %vm179 = vmor %vm177, %vm178
    %v180 = vsel %vm179, %v171, %v176
    %v181 = vrsqrt.pop %v110
    %v182 = vmul.f32 %v181, %v110
    %v183 = vmul.f32 %v182, %v181
    %v184 = vmul.f32 0.5, %v183
    %v185 = vsub.f32 1.5, %v184
    %v186 = vmul.f32 %v181, %v185
    %vm187 = vweird.f32 %v110
    %vm188 = vweird.f32 %v181
    %vm189 = vmor %vm187, %vm188
    %v190 = vsel %vm189, %v181, %v186
    %v191 = vmul.f32 %v46, %v120
    %v192 = vmul.f32 %v47, %v130
    %v193 = vmul.f32 %v48, %v140
    %v194 = vmul.f32 %v49, %v150
    %v195 = vmul.f32 %v50, %v160
    %v196 = vmul.f32 %v51, %v170
    %v197 = vmul.f32 %v52, %v180
    %v198 = vmul.f32 %v53, %v190
    %v200 = vperm.slane %v54, 0
    %v202 = vmul.f32 %v191, %v200
    %v203 = vmul.f32 %v192, %v200
    %v204 = vmul.f32 %v193, %v200
    %v205 = vmul.f32 %v194, %v200
    %v206 = vmul.f32 %v195, %v200
    %v207 = vmul.f32 %v196, %v200
    %v208 = vmul.f32 %v197, %v200
    %v209 = vmul.f32 %v198, %v200
    %218 = vst [vmem:[#allocation1] ss:$4 sm:$0xff] %v202
    %s219 = scalar_lea.vmem [#allocation1], 1
    %220 = vst [vmem:[%s219] ss:$4 sm:$0xff] %v203
    %s221 = scalar_lea.vmem [#allocation1], 2
    %222 = vst [vmem:[%s221] ss:$4 sm:$0xff] %v204
    %s223 = scalar_lea.vmem [#allocation1], 3
    %224 = vst [vmem:[%s223] ss:$4 sm:$0xff] %v205
    %s225 = scalar_lea.vmem [#allocation1], 32
    %226 = vst [vmem:[%s225] ss:$4 sm:$0xff] %v206
    %s227 = scalar_lea.vmem [#allocation1], 33
    %228 = vst [vmem:[%s227] ss:$4 sm:$0xff] %v207
    %s229 = scalar_lea.vmem [#allocation1], 34
    %230 = vst [vmem:[%s229] ss:$4 sm:$0xff] %v208
    %s231 = scalar_lea.vmem [#allocation1], 35
    %232 = vst [vmem:[%s231] ss:$4 sm:$0xff] %v209
    %v233 = vld.sshfl [vmem:[#allocation1] sm:$0xff pattern:$0x73625140]
    %v234 = vld.sshfl [vmem:[#allocation1 + $0x20] sm:$0xff pattern:$0x73625140]
    %v237 = vpack.c.bf16 %v234, %v233
    %v238 = vld [vmem:[%s3] sm:$0xf]
    %v239 = vld [vmem:[%s3 + $0x4] sm:$0xf]
    %v240 = vld [vmem:[%s3 + $0x8] sm:$0xf]
    %v241 = vld [vmem:[%s3 + $0xc] sm:$0xf]
    %v242 = vld [vmem:[%s4] sm:$0x1]
    %v244 = vperm.slane %v242, 0
    %v250 = vunpack.c.l.b16 %v238
    %v251 = vunpack.c.l.b16 %v239
    %v252 = vunpack.c.l.b16 %v240
    %v253 = vunpack.c.l.b16 %v241
    %v254 = vpack.c.b16 %v251, %v250
    %v255 = vpack.c.b16 %v253, %v252
    %vm258 = vcmask 261120
    %v260 = vsel %vm258, %v237, 0
    %262 = vmatpush.bf16.msra.mxu0 0
    %263 = vmatpush.bf16.msra.mxu0 0
    %264 = vmatpush.bf16.msra.mxu0 0
    %265 = vmatpush.bf16.msra.mxu0 0
    %266 = vmatpush.bf16.msra.mxu0 0
    %267 = vmatpush.bf16.msra.mxu0 0
    %268 = vmatpush.bf16.msra.mxu0 %v255
    %269 = vmatpush.bf16.msra.mxu0 %v254
    %270 = vmatmul.bf16.gmra.mxu0 %v260
    %v271 = vpop.f32.mrf.mxu0
    %v272 = vadd.f32 %v244, %v271
    %v273 = vpop.f32.mrf.mxu0
    %v274 = vadd.f32 %v244, %v273
    %275 = vdwg.mxu0
    %v276 = vxor.u32 %v272, 2147483648
    %v277 = vxor.u32 %v274, 2147483648
    %v278 = vmul.f32 %v276, 1.442695
    %v279 = vpow.pop %v278
    %v280 = vmul.f32 %v277, 1.442695
    %v281 = vpow.pop %v280
    %v282 = vadd.f32 %v279, 1.0
    %v283 = vadd.f32 %v281, 1.0
    %v284 = vrcp.pop %v282
    %v285 = vmul.f32 %v282, %v284
    %v286 = vsub.f32 1.0, %v285
    %v287 = vmul.f32 %v284, %v286
    %v288 = vadd.f32 %v284, %v287
    %vm289 = vweird.f32 %v282
    %vm290 = vweird.f32 %v284
    %vm291 = vmor %vm289, %vm290
    %v292 = vsel %vm291, %v284, %v288
    %v293 = vand.u32 2147483647, %v282
    %vm294 = vcmp.eq.f32.partialorder %v293, 8.507059e+37
    %v295 = vand.u32 %v282, 2147483648
    %v296 = vor.u32 1.1754944e-38, %v295
    %v297 = vsel %vm294, %v296, %v292
    %v298 = vmul.f32 1.0, %v297
    %v299 = vrcp.pop %v283
    %v300 = vmul.f32 %v283, %v299
    %v301 = vsub.f32 1.0, %v300
    %v302 = vmul.f32 %v299, %v301
    %v303 = vadd.f32 %v299, %v302
    %vm304 = vweird.f32 %v283
    %vm305 = vweird.f32 %v299
    %vm306 = vmor %vm304, %vm305
    %v307 = vsel %vm306, %v299, %v303
    %v308 = vand.u32 2147483647, %v283
    %vm309 = vcmp.eq.f32.partialorder %v308, 8.507059e+37
    %v310 = vand.u32 %v283, 2147483648
    %v311 = vor.u32 1.1754944e-38, %v310
    %v312 = vsel %vm309, %v311, %v307
    %v313 = vmul.f32 1.0, %v312
    %v316 = vrot.slane %v298, 2
    %v317 = vrot.slane %v298, 4
    %v318 = vrot.slane %v298, 6
    %v319 = vrot.slane %v313, 2
    %v320 = vrot.slane %v313, 4
    %v321 = vrot.slane %v313, 6
    %v328 = vpack.c.bf16 %v298, %v298
    %v329 = vpack.c.bf16 %v316, %v316
    %v330 = vpack.c.bf16 %v317, %v317
    %v331 = vpack.c.bf16 %v318, %v318
    %v332 = vpack.c.bf16 %v313, %v313
    %v333 = vpack.c.bf16 %v319, %v319
    %v334 = vpack.c.bf16 %v320, %v320
    %v335 = vpack.c.bf16 %v321, %v321
    %vm336 = vcmask 253952
    %337 = vst.msk [vmem:[#allocation3] sm:$0x1] %vm336, %v328
    %338 = vst.msk [vmem:[#allocation3 + $0x1] sm:$0x1] %vm336, %v329
    %339 = vst.msk [vmem:[#allocation3 + $0x2] sm:$0x1] %vm336, %v330
    %340 = vst.msk [vmem:[#allocation3 + $0x3] sm:$0x1] %vm336, %v331
    %341 = vst.msk [vmem:[#allocation3 + $0x4] sm:$0x1] %vm336, %v332
    %342 = vst.msk [vmem:[#allocation3 + $0x5] sm:$0x1] %vm336, %v333
    %343 = vst.msk [vmem:[#allocation3 + $0x6] sm:$0x1] %vm336, %v334
    %344 = vst.msk [vmem:[#allocation3 + $0x7] sm:$0x1] %vm336, %v335
    %v345 = vtanh.pop %v272
    %v346 = vtanh.pop %v274
    %347 = vrot.lane.b32.xlu0 %v298, 96
    %v348 = vpop.permute.xlu0 %347
    %349 = vrot.lane.b32.xlu0 %v313, 96
    %v350 = vpop.permute.xlu0 %349
    %v353 = vmul.f32 %v345, %v348
    %v354 = vmul.f32 %v346, %v350
    %v357 = vrot.slane %v353, 2
    %v358 = vrot.slane %v353, 4
    %v359 = vrot.slane %v353, 6
    %v360 = vrot.slane %v354, 2
    %v361 = vrot.slane %v354, 4
    %v362 = vrot.slane %v354, 6
    %v369 = vpack.c.bf16 %v353, %v353
    %v370 = vpack.c.bf16 %v357, %v357
    %v371 = vpack.c.bf16 %v358, %v358
    %v372 = vpack.c.bf16 %v359, %v359
    %v373 = vpack.c.bf16 %v354, %v354
    %v374 = vpack.c.bf16 %v360, %v360
    %v375 = vpack.c.bf16 %v361, %v361
    %v376 = vpack.c.bf16 %v362, %v362
    %v385 = vrot.slane %v369, 3
    %v386 = vrot.slane %v370, 3
    %v387 = vrot.slane %v371, 3
    %v388 = vrot.slane %v372, 3
    %v389 = vrot.slane %v373, 3
    %v390 = vrot.slane %v374, 3
    %v391 = vrot.slane %v375, 3
    %v392 = vrot.slane %v376, 3
    %vm393 = vcmask 1040384
    %v396 = vsel %vm393, %v369, %v385
    %v400 = vsel %vm393, %v370, %v386
    %v404 = vsel %vm393, %v371, %v387
    %v408 = vsel %vm393, %v372, %v388
    %v412 = vsel %vm393, %v373, %v389
    %v416 = vsel %vm393, %v374, %v390
    %v420 = vsel %vm393, %v375, %v391
    %v424 = vsel %vm393, %v376, %v392
    %426 = vrot.lane.b32.xlu0 %v396, 96
    %v427 = vpop.permute.xlu0 %426
    %428 = vrot.lane.b32.xlu0 %v400, 96
    %v429 = vpop.permute.xlu0 %428
    %430 = vrot.lane.b32.xlu0 %v404, 96
    %v431 = vpop.permute.xlu0 %430
    %432 = vrot.lane.b32.xlu0 %v408, 96
    %v433 = vpop.permute.xlu0 %432
    %434 = vrot.lane.b32.xlu0 %v412, 96
    %v435 = vpop.permute.xlu0 %434
    %436 = vrot.lane.b32.xlu0 %v416, 96
    %v437 = vpop.permute.xlu0 %436
    %438 = vrot.lane.b32.xlu0 %v420, 96
    %v439 = vpop.permute.xlu0 %438
    %440 = vrot.lane.b32.xlu0 %v424, 96
    %v441 = vpop.permute.xlu0 %440
    %450 = vst.msk [vmem:[#allocation4] sm:$0x1] %vm336, %v427
    %451 = vst.msk [vmem:[#allocation4 + $0x1] sm:$0x1] %vm336, %v429
    %452 = vst.msk [vmem:[#allocation4 + $0x2] sm:$0x1] %vm336, %v431
    %453 = vst.msk [vmem:[#allocation4 + $0x3] sm:$0x1] %vm336, %v433
    %454 = vst.msk [vmem:[#allocation4 + $0x4] sm:$0x1] %vm336, %v435
    %455 = vst.msk [vmem:[#allocation4 + $0x5] sm:$0x1] %vm336, %v437
    %456 = vst.msk [vmem:[#allocation4 + $0x6] sm:$0x1] %vm336, %v439
    %457 = vst.msk [vmem:[#allocation4 + $0x7] sm:$0x1] %vm336, %v441
    %458 = vst [vmem:[#allocation1] ss:$4 sm:$0xff] %v298
    %v459 = vld.sshfl [vmem:[#allocation1] sm:$0xff pattern:$0x73625140]
    %s460 = scalar_lea.vmem [#allocation1], 32
    %461 = vst [vmem:[%s460] ss:$4 sm:$0xff] %v316
    %v462 = vld.sshfl [vmem:[#allocation1 + $0x20] sm:$0xff pattern:$0x73625140]
    %463 = vst [vmem:[#allocation1] ss:$4 sm:$0xff] %v317
    %v464 = vld.sshfl [vmem:[#allocation1] sm:$0xff pattern:$0x73625140]
    %465 = vst [vmem:[%s460] ss:$4 sm:$0xff] %v318
    %v466 = vld.sshfl [vmem:[#allocation1 + $0x20] sm:$0xff pattern:$0x73625140]
    %467 = vst [vmem:[#allocation1] ss:$4 sm:$0xff] %v313
    %v468 = vld.sshfl [vmem:[#allocation1] sm:$0xff pattern:$0x73625140]
    %469 = vst [vmem:[%s460] ss:$4 sm:$0xff] %v319
    %v470 = vld.sshfl [vmem:[#allocation1 + $0x20] sm:$0xff pattern:$0x73625140]
    %471 = vst [vmem:[#allocation1] ss:$4 sm:$0xff] %v320
    %v472 = vld.sshfl [vmem:[#allocation1] sm:$0xff pattern:$0x73625140]
    %473 = vst [vmem:[%s460] ss:$4 sm:$0xff] %v321
    %v474 = vld.sshfl [vmem:[#allocation1 + $0x20] sm:$0xff pattern:$0x73625140]
    %475 = vrot.lane.b32.xlu0 %v459, 32
    %v476 = vpop.permute.xlu0 %475
    %477 = vrot.lane.b32.xlu0 %v462, 32
    %v478 = vpop.permute.xlu0 %477
    %479 = vrot.lane.b32.xlu0 %v464, 32
    %v480 = vpop.permute.xlu0 %479
    %481 = vrot.lane.b32.xlu0 %v466, 32
    %v482 = vpop.permute.xlu0 %481
    %483 = vrot.lane.b32.xlu0 %v468, 32
    %v484 = vpop.permute.xlu0 %483
    %485 = vrot.lane.b32.xlu0 %v470, 32
    %v486 = vpop.permute.xlu0 %485
    %487 = vrot.lane.b32.xlu0 %v472, 32
    %v488 = vpop.permute.xlu0 %487
    %489 = vrot.lane.b32.xlu0 %v474, 32
    %v490 = vpop.permute.xlu0 %489
    %499 = vst.msk [vmem:[%s10] sm:$0x3] %vm63, %v476
    %500 = vst.msk [vmem:[%s10 + $0x2] sm:$0x3] %vm63, %v478
    %501 = vst.msk [vmem:[%s10 + $0x4] sm:$0x3] %vm63, %v480
    %502 = vst.msk [vmem:[%s10 + $0x6] sm:$0x3] %vm63, %v482
    %503 = vst.msk [vmem:[%s10 + $0x8] sm:$0x3] %vm63, %v484
    %504 = vst.msk [vmem:[%s10 + $0xa] sm:$0x3] %vm63, %v486
    %505 = vst.msk [vmem:[%s10 + $0xc] sm:$0x3] %vm63, %v488
    %506 = vst.msk [vmem:[%s10 + $0xe] sm:$0x3] %vm63, %v490
    %v507 = vld [vmem:[#allocation2] sm:$0x3]
    %v508 = vld [vmem:[#allocation3] sm:$0x1]
    %v509 = vunpack.c.l.bf16 %v508
    %v510 = vmul.f32 %v509, %v507
    %v511 = vld [vmem:[#allocation4] sm:$0x1]
    %v512 = vunpack.c.l.bf16 %v511
    %v513 = vadd.f32 %v510, %v512
    %v514 = vtanh.pop %v513
    %v515 = vld [vmem:[%s10] sm:$0x3]
    %v516 = vmul.f32 %v514, %v515
    %517 = vst.msk [vmem:[%s10] sm:$0x3] %vm63, %v516
    %s518 = scalar_lea.vmem [#allocation3], 1
    %v519 = vld [vmem:[%s518] sm:$0x1]
    %v520 = vunpack.c.l.bf16 %v519
    %v521 = vmul.f32 %v520, %v513
    %s522 = scalar_lea.vmem [#allocation4], 1
    %v523 = vld [vmem:[%s522] sm:$0x1]
    %v524 = vunpack.c.l.bf16 %v523
    %v525 = vadd.f32 %v521, %v524
    %v526 = vtanh.pop %v525
    %s527 = scalar_lea.vmem %s10, 2
    %v528 = vld [vmem:[%s527] sm:$0x3]
    %v529 = vmul.f32 %v526, %v528
    %530 = vst.msk [vmem:[%s527] sm:$0x3] %vm63, %v529
    %s531 = scalar_lea.vmem [#allocation3], 2
    %v532 = vld [vmem:[%s531] sm:$0x1]
    %v533 = vunpack.c.l.bf16 %v532
    %v534 = vmul.f32 %v533, %v525
    %s535 = scalar_lea.vmem [#allocation4], 2
    %v536 = vld [vmem:[%s535] sm:$0x1]
    %v537 = vunpack.c.l.bf16 %v536
    %v538 = vadd.f32 %v534, %v537
    %v539 = vtanh.pop %v538
    %s540 = scalar_lea.vmem %s10, 4
    %v541 = vld [vmem:[%s540] sm:$0x3]
    %v542 = vmul.f32 %v539, %v541
    %543 = vst.msk [vmem:[%s540] sm:$0x3] %vm63, %v542
    %s544 = scalar_lea.vmem [#allocation3], 3
    %v545 = vld [vmem:[%s544] sm:$0x1]
    %v546 = vunpack.c.l.bf16 %v545
    %v547 = vmul.f32 %v546, %v538
    %s548 = scalar_lea.vmem [#allocation4], 3
    %v549 = vld [vmem:[%s548] sm:$0x1]
    %v550 = vunpack.c.l.bf16 %v549
    %v551 = vadd.f32 %v547, %v550
    %v552 = vtanh.pop %v551
    %s553 = scalar_lea.vmem %s10, 6
    %v554 = vld [vmem:[%s553] sm:$0x3]
    %v555 = vmul.f32 %v552, %v554
    %556 = vst.msk [vmem:[%s553] sm:$0x3] %vm63, %v555
    %s557 = scalar_lea.vmem [#allocation3], 4
    %v558 = vld [vmem:[%s557] sm:$0x1]
    %v559 = vunpack.c.l.bf16 %v558
    %v560 = vmul.f32 %v559, %v551
    %s561 = scalar_lea.vmem [#allocation4], 4
    %v562 = vld [vmem:[%s561] sm:$0x1]
    %v563 = vunpack.c.l.bf16 %v562
    %v564 = vadd.f32 %v560, %v563
    %v565 = vtanh.pop %v564
    %s566 = scalar_lea.vmem %s10, 8
    %v567 = vld [vmem:[%s566] sm:$0x3]
    %v568 = vmul.f32 %v565, %v567
    %569 = vst.msk [vmem:[%s566] sm:$0x3] %vm63, %v568
    %s570 = scalar_lea.vmem [#allocation3], 5
    %v571 = vld [vmem:[%s570] sm:$0x1]
    %v572 = vunpack.c.l.bf16 %v571
    %v573 = vmul.f32 %v572, %v564
    %s574 = scalar_lea.vmem [#allocation4], 5
    %v575 = vld [vmem:[%s574] sm:$0x1]
    %v576 = vunpack.c.l.bf16 %v575
    %v577 = vadd.f32 %v573, %v576
    %v578 = vtanh.pop %v577
    %s579 = scalar_lea.vmem %s10, 10
    %v580 = vld [vmem:[%s579] sm:$0x3]
    %v581 = vmul.f32 %v578, %v580
    %582 = vst.msk [vmem:[%s579] sm:$0x3] %vm63, %v581
    %s583 = scalar_lea.vmem [#allocation3], 6
    %v584 = vld [vmem:[%s583] sm:$0x1]
    %v585 = vunpack.c.l.bf16 %v584
    %v586 = vmul.f32 %v585, %v577
    %s587 = scalar_lea.vmem [#allocation4], 6
    %v588 = vld [vmem:[%s587] sm:$0x1]
    %v589 = vunpack.c.l.bf16 %v588
    %v590 = vadd.f32 %v586, %v589
    %v591 = vtanh.pop %v590
    %s592 = scalar_lea.vmem %s10, 12
    %v593 = vld [vmem:[%s592] sm:$0x3]
    %v594 = vmul.f32 %v591, %v593
    %595 = vst.msk [vmem:[%s592] sm:$0x3] %vm63, %v594
    %s596 = scalar_lea.vmem [#allocation3], 7
    %v597 = vld [vmem:[%s596] sm:$0x1]
    %v598 = vunpack.c.l.bf16 %v597
    %v599 = vmul.f32 %v598, %v590
    %s600 = scalar_lea.vmem [#allocation4], 7
    %v601 = vld [vmem:[%s600] sm:$0x1]
    %v602 = vunpack.c.l.bf16 %v601
    %v603 = vadd.f32 %v599, %v602
    %v604 = vtanh.pop %v603
    %s605 = scalar_lea.vmem %s10, 14
    %v606 = vld [vmem:[%s605] sm:$0x3]
    %v607 = vmul.f32 %v604, %v606
    %608 = vst.msk [vmem:[%s605] sm:$0x3] %vm63, %v607
    %609 = vst.msk [vmem:[#allocation2] sm:$0x3] %vm63, %v603
    %610 = vst.msk [vmem:[#allocation5] sm:$0x3] %vm63, %v603
    %v611 = vld [vmem:[%s10] sm:$0x3]
    %v612 = vld [vmem:[%s10 + $0x2] sm:$0x3]
    %v613 = vld [vmem:[%s10 + $0x4] sm:$0x3]
    %v614 = vld [vmem:[%s10 + $0x6] sm:$0x3]
    %v615 = vld [vmem:[%s10 + $0x8] sm:$0x3]
    %v616 = vld [vmem:[%s10 + $0xa] sm:$0x3]
    %v617 = vld [vmem:[%s10 + $0xc] sm:$0x3]
    %v618 = vld [vmem:[%s10 + $0xe] sm:$0x3]
    %v619 = vadd.f32 %v46, %v611
    %v620 = vadd.f32 %v47, %v612
    %v621 = vadd.f32 %v48, %v613
    %v622 = vadd.f32 %v49, %v614
    %v623 = vadd.f32 %v50, %v615
    %v624 = vadd.f32 %v51, %v616
    %v625 = vadd.f32 %v52, %v617
    %v626 = vadd.f32 %v53, %v618
    %v627 = vld [vmem:[%s5] sm:$0x1]
    %v628 = vmul.f32 %v619, %v619
    %v629 = vmul.f32 %v620, %v620
    %v630 = vmul.f32 %v621, %v621
    %v631 = vmul.f32 %v622, %v622
    %v632 = vmul.f32 %v623, %v623
    %v633 = vmul.f32 %v624, %v624
    %v634 = vmul.f32 %v625, %v625
    %v635 = vmul.f32 %v626, %v626
    %v636 = vsel %vm63, %v628, 0.0
    %637 = vadd.xlane.f32.xlu0 %v636
    %v638 = vpop.xlane.xlu0 %637
    %v639 = vsel %vm63, %v629, 0.0
    %640 = vadd.xlane.f32.xlu0 %v639
    %v641 = vpop.xlane.xlu0 %640
    %v642 = vsel %vm63, %v630, 0.0
    %643 = vadd.xlane.f32.xlu0 %v642
    %v644 = vpop.xlane.xlu0 %643
    %v645 = vsel %vm63, %v631, 0.0
    %646 = vadd.xlane.f32.xlu0 %v645
    %v647 = vpop.xlane.xlu0 %646
    %v648 = vsel %vm63, %v632, 0.0
    %649 = vadd.xlane.f32.xlu0 %v648
    %v650 = vpop.xlane.xlu0 %649
    %v651 = vsel %vm63, %v633, 0.0
    %652 = vadd.xlane.f32.xlu0 %v651
    %v653 = vpop.xlane.xlu0 %652
    %v654 = vsel %vm63, %v634, 0.0
    %655 = vadd.xlane.f32.xlu0 %v654
    %v656 = vpop.xlane.xlu0 %655
    %v657 = vsel %vm63, %v635, 0.0
    %658 = vadd.xlane.f32.xlu0 %v657
    %v659 = vpop.xlane.xlu0 %658
    %v660 = vmul.f32 %v638, %v94
    %v661 = vmul.f32 %v641, %v94
    %v662 = vmul.f32 %v644, %v94
    %v663 = vmul.f32 %v647, %v94
    %v664 = vmul.f32 %v650, %v94
    %v665 = vmul.f32 %v653, %v94
    %v666 = vmul.f32 %v656, %v94
    %v667 = vmul.f32 %v659, %v94
    %v668 = vadd.f32 %v660, 1e-06
    %v669 = vadd.f32 %v661, 1e-06
    %v670 = vadd.f32 %v662, 1e-06
    %v671 = vadd.f32 %v663, 1e-06
    %v672 = vadd.f32 %v664, 1e-06
    %v673 = vadd.f32 %v665, 1e-06
    %v674 = vadd.f32 %v666, 1e-06
    %v675 = vadd.f32 %v667, 1e-06
    %v676 = vrsqrt.pop %v668
    %v677 = vmul.f32 %v676, %v668
    %v678 = vmul.f32 %v677, %v676
    %v679 = vmul.f32 0.5, %v678
    %v680 = vsub.f32 1.5, %v679
    %v681 = vmul.f32 %v676, %v680
    %vm682 = vweird.f32 %v668
    %vm683 = vweird.f32 %v676
    %vm684 = vmor %vm682, %vm683
    %v685 = vsel %vm684, %v676, %v681
    %v686 = vrsqrt.pop %v669
    %v687 = vmul.f32 %v686, %v669
    %v688 = vmul.f32 %v687, %v686
    %v689 = vmul.f32 0.5, %v688
    %v690 = vsub.f32 1.5, %v689
    %v691 = vmul.f32 %v686, %v690
    %vm692 = vweird.f32 %v669
    %vm693 = vweird.f32 %v686
    %vm694 = vmor %vm692, %vm693
    %v695 = vsel %vm694, %v686, %v691
    %v696 = vrsqrt.pop %v670
    %v697 = vmul.f32 %v696, %v670
    %v698 = vmul.f32 %v697, %v696
    %v699 = vmul.f32 0.5, %v698
    %v700 = vsub.f32 1.5, %v699
    %v701 = vmul.f32 %v696, %v700
    %vm702 = vweird.f32 %v670
    %vm703 = vweird.f32 %v696
    %vm704 = vmor %vm702, %vm703
    %v705 = vsel %vm704, %v696, %v701
    %v706 = vrsqrt.pop %v671
    %v707 = vmul.f32 %v706, %v671
    %v708 = vmul.f32 %v707, %v706
    %v709 = vmul.f32 0.5, %v708
    %v710 = vsub.f32 1.5, %v709
    %v711 = vmul.f32 %v706, %v710
    %vm712 = vweird.f32 %v671
    %vm713 = vweird.f32 %v706
    %vm714 = vmor %vm712, %vm713
    %v715 = vsel %vm714, %v706, %v711
    %v716 = vrsqrt.pop %v672
    %v717 = vmul.f32 %v716, %v672
    %v718 = vmul.f32 %v717, %v716
    %v719 = vmul.f32 0.5, %v718
    %v720 = vsub.f32 1.5, %v719
    %v721 = vmul.f32 %v716, %v720
    %vm722 = vweird.f32 %v672
    %vm723 = vweird.f32 %v716
    %vm724 = vmor %vm722, %vm723
    %v725 = vsel %vm724, %v716, %v721
    %v726 = vrsqrt.pop %v673
    %v727 = vmul.f32 %v726, %v673
    %v728 = vmul.f32 %v727, %v726
    %v729 = vmul.f32 0.5, %v728
    %v730 = vsub.f32 1.5, %v729
    %v731 = vmul.f32 %v726, %v730
    %vm732 = vweird.f32 %v673
    %vm733 = vweird.f32 %v726
    %vm734 = vmor %vm732, %vm733
    %v735 = vsel %vm734, %v726, %v731
    %v736 = vrsqrt.pop %v674
    %v737 = vmul.f32 %v736, %v674
    %v738 = vmul.f32 %v737, %v736
    %v739 = vmul.f32 0.5, %v738
    %v740 = vsub.f32 1.5, %v739
    %v741 = vmul.f32 %v736, %v740
    %vm742 = vweird.f32 %v674
    %vm743 = vweird.f32 %v736
    %vm744 = vmor %vm742, %vm743
    %v745 = vsel %vm744, %v736, %v741
    %v746 = vrsqrt.pop %v675
    %v747 = vmul.f32 %v746, %v675
    %v748 = vmul.f32 %v747, %v746
    %v749 = vmul.f32 0.5, %v748
    %v750 = vsub.f32 1.5, %v749
    %v751 = vmul.f32 %v746, %v750
    %vm752 = vweird.f32 %v675
    %vm753 = vweird.f32 %v746
    %vm754 = vmor %vm752, %vm753
    %v755 = vsel %vm754, %v746, %v751
    %v756 = vmul.f32 %v619, %v685
    %v757 = vmul.f32 %v620, %v695
    %v758 = vmul.f32 %v621, %v705
    %v759 = vmul.f32 %v622, %v715
    %v760 = vmul.f32 %v623, %v725
    %v761 = vmul.f32 %v624, %v735
    %v762 = vmul.f32 %v625, %v745
    %v763 = vmul.f32 %v626, %v755
    %v765 = vperm.slane %v627, 0
    %v767 = vmul.f32 %v756, %v765
    %v768 = vmul.f32 %v757, %v765
    %v769 = vmul.f32 %v758, %v765
    %v770 = vmul.f32 %v759, %v765
    %v771 = vmul.f32 %v760, %v765
    %v772 = vmul.f32 %v761, %v765
    %v773 = vmul.f32 %v762, %v765
    %v774 = vmul.f32 %v763, %v765
    %783 = vst [vmem:[#allocation1] ss:$4 sm:$0xff] %v767
    %s784 = scalar_lea.vmem [#allocation1], 1
    %785 = vst [vmem:[%s784] ss:$4 sm:$0xff] %v768
    %s786 = scalar_lea.vmem [#allocation1], 2
    %787 = vst [vmem:[%s786] ss:$4 sm:$0xff] %v769
    %s788 = scalar_lea.vmem [#allocation1], 3
    %789 = vst [vmem:[%s788] ss:$4 sm:$0xff] %v770
    %s790 = scalar_lea.vmem [#allocation1], 32
    %791 = vst [vmem:[%s790] ss:$4 sm:$0xff] %v771
    %s792 = scalar_lea.vmem [#allocation1], 33
    %793 = vst [vmem:[%s792] ss:$4 sm:$0xff] %v772
    %s794 = scalar_lea.vmem [#allocation1], 34
    %795 = vst [vmem:[%s794] ss:$4 sm:$0xff] %v773
    %s796 = scalar_lea.vmem [#allocation1], 35
    %797 = vst [vmem:[%s796] ss:$4 sm:$0xff] %v774
    %v798 = vld.sshfl [vmem:[#allocation1] sm:$0xff pattern:$0x73625140]
    %v799 = vld.sshfl [vmem:[#allocation1 + $0x20] sm:$0xff pattern:$0x73625140]
    %v802 = vpack.c.bf16 %v799, %v798
    %v803 = vld [vmem:[%s6] sm:$0xf]
    %v804 = vld [vmem:[%s6 + $0x4] sm:$0xf]
    %v805 = vld [vmem:[%s6 + $0x8] sm:$0xf]
    %v806 = vld [vmem:[%s6 + $0xc] sm:$0xf]
    %v807 = vld [vmem:[%s7] sm:$0x1]
    %v809 = vperm.slane %v807, 0
    %v815 = vunpack.c.l.b16 %v803
    %v816 = vunpack.c.l.b16 %v804
    %v817 = vunpack.c.l.b16 %v805
    %v818 = vunpack.c.l.b16 %v806
    %v819 = vpack.c.b16 %v816, %v815
    %v820 = vpack.c.b16 %v818, %v817
    %v824 = vsel %vm258, %v802, 0
    %826 = vmatpush.bf16.msra.mxu0 0
    %827 = vmatpush.bf16.msra.mxu0 0
    %828 = vmatpush.bf16.msra.mxu0 0
    %829 = vmatpush.bf16.msra.mxu0 0
    %830 = vmatpush.bf16.msra.mxu0 0
    %831 = vmatpush.bf16.msra.mxu0 0
    %832 = vmatpush.bf16.msra.mxu0 %v820
    %833 = vmatpush.bf16.msra.mxu0 %v819
    %834 = vmatmul.bf16.gmra.mxu0 %v824
    %v835 = vpop.f32.mrf.mxu0
    %v836 = vadd.f32 %v809, %v835
    %v837 = vpop.f32.mrf.mxu0
    %v838 = vadd.f32 %v809, %v837
    %839 = vdwg.mxu0
    %v840 = vxor.u32 %v836, 2147483648
    %v841 = vxor.u32 %v838, 2147483648
    %v842 = vmul.f32 %v840, 1.442695
    %v843 = vpow.pop %v842
    %v844 = vmul.f32 %v841, 1.442695
    %v845 = vpow.pop %v844
    %v846 = vadd.f32 %v843, 1.0
    %v847 = vadd.f32 %v845, 1.0
    %v848 = vrcp.pop %v846
    %v849 = vmul.f32 %v846, %v848
    %v850 = vsub.f32 1.0, %v849
    %v851 = vmul.f32 %v848, %v850
    %v852 = vadd.f32 %v848, %v851
    %vm853 = vweird.f32 %v846
    %vm854 = vweird.f32 %v848
    %vm855 = vmor %vm853, %vm854
    %v856 = vsel %vm855, %v848, %v852
    %v857 = vand.u32 2147483647, %v846
    %vm858 = vcmp.eq.f32.partialorder %v857, 8.507059e+37
    %v859 = vand.u32 %v846, 2147483648
    %v860 = vor.u32 1.1754944e-38, %v859
    %v861 = vsel %vm858, %v860, %v856
    %v862 = vmul.f32 1.0, %v861
    %v863 = vrcp.pop %v847
    %v864 = vmul.f32 %v847, %v863
    %v865 = vsub.f32 1.0, %v864
    %v866 = vmul.f32 %v863, %v865
    %v867 = vadd.f32 %v863, %v866
    %vm868 = vweird.f32 %v847
    %vm869 = vweird.f32 %v863
    %vm870 = vmor %vm868, %vm869
    %v871 = vsel %vm870, %v863, %v867
    %v872 = vand.u32 2147483647, %v847
    %vm873 = vcmp.eq.f32.partialorder %v872, 8.507059e+37
    %v874 = vand.u32 %v847, 2147483648
    %v875 = vor.u32 1.1754944e-38, %v874
    %v876 = vsel %vm873, %v875, %v871
    %v877 = vmul.f32 1.0, %v876
    %v878 = vmul.f32 %v836, %v862
    %v879 = vmul.f32 %v838, %v877
    %882 = vrot.lane.b32.xlu0 %v878, 64
    %v883 = vpop.permute.xlu0 %882
    %884 = vrot.lane.b32.xlu0 %v879, 64
    %v885 = vpop.permute.xlu0 %884
    %v888 = vmul.f32 %v836, %v883
    %v889 = vmul.f32 %v838, %v885
    %v890 = vpack.c.bf16 %v889, %v888
    %v891 = vld [vmem:[%s8] sm:$0xf]
    %v892 = vld [vmem:[%s8 + $0x4] sm:$0xf]
    %v893 = vld [vmem:[%s8 + $0x8] sm:$0xf]
    %v894 = vld [vmem:[%s8 + $0xc] sm:$0xf]
    %v895 = vld [vmem:[%s8 + $0x10] sm:$0xf]
    %v896 = vld [vmem:[%s8 + $0x14] sm:$0xf]
    %v897 = vld [vmem:[%s8 + $0x18] sm:$0xf]
    %v898 = vld [vmem:[%s8 + $0x1c] sm:$0xf]
    %v899 = vld [vmem:[%s9] sm:$0x1]
    %v901 = vperm.slane %v899, 0
    %v911 = vunpack.c.l.b16 %v891
    %v912 = vunpack.c.l.b16 %v892
    %v913 = vunpack.c.l.b16 %v893
    %v914 = vunpack.c.l.b16 %v894
    %v915 = vunpack.c.l.b16 %v895
    %v916 = vunpack.c.l.b16 %v896
    %v917 = vunpack.c.l.b16 %v897
    %v918 = vunpack.c.l.b16 %v898
    %v919 = vpack.c.b16 %v912, %v911
    %v920 = vpack.c.b16 %v914, %v913
    %v921 = vpack.c.b16 %v916, %v915
    %v922 = vpack.c.b16 %v918, %v917
    %vm927 = vcmask 523264
    %v929 = vsel %vm927, %v890, 0
    %931 = vmatpush.bf16.msra.mxu0 0
    %932 = vmatpush.bf16.msra.mxu0 0
    %933 = vmatpush.bf16.msra.mxu0 0
    %934 = vmatpush.bf16.msra.mxu0 0
    %935 = vmatpush.bf16.msra.mxu0 %v922
    %936 = vmatpush.bf16.msra.mxu0 %v921
    %937 = vmatpush.bf16.msra.mxu0 %v920
    %938 = vmatpush.bf16.msra.mxu0 %v919
    %939 = vmatmul.bf16.gmra.mxu0 %v929
    %v940 = vpop.f32.mrf.mxu0
    %v941 = vadd.f32 %v901, %v940
    %v942 = vpop.f32.mrf.mxu0
    %v943 = vadd.f32 %v901, %v942
    %944 = vdwg.mxu0
    %v947 = vrot.slane %v941, 2
    %v948 = vrot.slane %v941, 4
    %v949 = vrot.slane %v941, 6
    %v950 = vrot.slane %v943, 2
    %v951 = vrot.slane %v943, 4
    %v952 = vrot.slane %v943, 6
    %v959 = vadd.f32 %v619, %v941
    %v960 = vadd.f32 %v620, %v947
    %v961 = vadd.f32 %v621, %v948
    %v962 = vadd.f32 %v622, %v949
    %v963 = vadd.f32 %v623, %v943
    %v964 = vadd.f32 %v624, %v950
    %v965 = vadd.f32 %v625, %v951
    %v966 = vadd.f32 %v626, %v952
    %967 = vst.msk [vmem:[%s10] sm:$0x3] %vm63, %v959
    %968 = vst.msk [vmem:[%s10 + $0x2] sm:$0x3] %vm63, %v960
    %969 = vst.msk [vmem:[%s10 + $0x4] sm:$0x3] %vm63, %v961
    %970 = vst.msk [vmem:[%s10 + $0x6] sm:$0x3] %vm63, %v962
    %971 = vst.msk [vmem:[%s10 + $0x8] sm:$0x3] %vm63, %v963
    %972 = vst.msk [vmem:[%s10 + $0xa] sm:$0x3] %vm63, %v964
    %973 = vst.msk [vmem:[%s10 + $0xc] sm:$0x3] %vm63, %v965
    %974 = vst.msk [vmem:[%s10 + $0xe] sm:$0x3] %vm63, %v966
    // Predicated region
    $region46: #{qlstm_lm_forward.3} parent=1 // pred_check
      _
    $region47: #{qlstm_lm_forward.3} parent=1 // pred_check_branch
      %976 = sbr.rel (0) target = $region49
    $region48: #{qlstm_lm_forward.3} parent=1 // pred_region
      _
    $region49: #{qlstm_lm_forward.3} parent=1 // pred_fallthru
      _
    // Predicated region
    $region50: #{qlstm_lm_forward.3} parent=1 // pred_check
      _
    $region51: #{qlstm_lm_forward.3} parent=1 // pred_check_branch
      %978 = sbr.rel (0) target = $region53
    $region52: #{qlstm_lm_forward.3} parent=1 // pred_region
      %980 = vsyncadd [#allocation6], 0
      %s982 = sshll.u32 [#allocation5], 4
      %s983 = int_to_ptr.vmem [resolvable:$true] %s982
      %s984 = sshll.u32 %s11, 4
      %s985 = int_to_ptr.hbm [resolvable:$true] %s984
      %987 = dma.vmem_to_hbm [thread:$0]  %s983, 32, %s985, [#allocation6]
    $region53: #{qlstm_lm_forward.3} parent=1 // pred_fallthru
      _
    // Predicated region
    $region54: #{qlstm_lm_forward.3} parent=1 // pred_check
      _
    $region55: #{qlstm_lm_forward.3} parent=1 // pred_check_branch
      %989 = sbr.rel (0) target = $region57
    $region56: #{qlstm_lm_forward.3} parent=1 // pred_region
      _
    $region57: #{qlstm_lm_forward.3} parent=1 // pred_fallthru
      _
    // Predicated region
    $region58: #{qlstm_lm_forward.3} parent=1 // pred_check
      _
    $region59: #{qlstm_lm_forward.3} parent=1 // pred_check_branch
      %991 = sbr.rel (0) target = $region61
    $region60: #{qlstm_lm_forward.3} parent=1 // pred_region
      %993 = dma.done [#allocation6], 32
    $region61: #{qlstm_lm_forward.3} parent=1 // pred_fallthru
      _
    %994 = vsyncpa [#allocation6], 1

</llo_original>
